<compile_context>
chip_gen: v7x
topology: tpu7x:2x2x1
jax: 0.10.0
libtpu: 0.0.40
codegen_flags: <defaults>
</compile_context>

<pallas_src>
import functools

import jax
import jax.numpy as jnp
import numpy as np
from jax.experimental import pallas as pl
from jax.experimental.pallas import tpu as pltpu


SIGMA = 4.0
KS = 2 * int(4.0 * SIGMA + 0.5) + 1  # 33
PAD = KS // 2                        # 16

_LANE = 128
_MAX_BATCH_TILE = 8
_TARGET_BLOCK_BYTES = 1 << 20        # ~1 MiB of in+out bytes per grid step


def _gaussian_kernel1d_np(kernel_size: int, sigma: float) -> np.ndarray:
    half = (kernel_size - 1) * 0.5
    x = np.linspace(-half, half, kernel_size, dtype=np.float64)
    pdf = np.exp(-0.5 * (x / sigma) ** 2)
    return pdf / pdf.sum()


def _build_blur_matrix_np(out_size: int, in_size: int) -> np.ndarray:
    """B[p, s] such that B @ x == gaussian_blur(zero_pad(nearest_upsample(x))) along one axis.

    Fuses (a) PyTorch F.interpolate(mode='nearest') from in_size -> out_size
    and (b) the 1-D Gaussian cross-correlation with zero padding PAD, so the
    Pallas kernel only ever touches the small unpadded input.
    """
    k1d = _gaussian_kernel1d_np(KS, SIGMA)
    if out_size == in_size:
        src = np.arange(out_size, dtype=np.int64)
    else:
        # PyTorch legacy 'nearest': src = floor(dst * in/out), clamped
        src = np.floor(np.arange(out_size) * (in_size / out_size)).astype(np.int64)
        src = np.minimum(src, in_size - 1)
    mat = np.zeros((out_size, in_size), dtype=np.float64)
    p = np.arange(out_size)
    for i in range(KS):
        u = p + i - PAD                      # row index in the (upsampled, unpadded) image
        valid = (u >= 0) & (u < out_size)    # zero padding outside
        np.add.at(mat, (p[valid], src[u[valid]]), k1d[i])
    return mat.astype(np.float32)


def _blur_kernel(brow_ref, bcolT_ref, x_ref, o_ref, *, batch_tile, merge_col):
    # brow_ref:  (H_out, H_in)          fused upsample+pad+blur, rows
    # bcolT_ref: (W_in,  W_out_pad)     fused upsample+pad+blur, cols (lane-padded)
    # x_ref:     (bt, H_in, W_in)       raw patch scores (channel dim dropped)
    # o_ref:     (bt, H_out, W_out_pad)
    brow = brow_ref[...]
    bcolT = bcolT_ref[...]
    _, h_in, w_in = x_ref.shape
    dot = functools.partial(jnp.dot,
                            preferred_element_type=jnp.float32,
                            precision=jax.lax.Precision.HIGHEST)
    if merge_col:
        # Single MXU call for the column blur of the whole batch tile.
        # h_in % 8 == 0 guarantees the (bt, H_in, W_in) -> (bt*H_in, W_in)
        # collapse is sublane-aligned (no relayout copy).
        xf = x_ref[...].reshape(batch_tile * h_in, w_in)
        tmp = dot(xf, bcolT)                                   # (bt*H_in, W_out_pad)
        for b in range(batch_tile):                            # short static unroll
            o_ref[b] = dot(brow, tmp[b * h_in:(b + 1) * h_in, :])
    else:
        for b in range(batch_tile):
            o_ref[b] = dot(brow, dot(x_ref[b], bcolT))


def anomaly_map_generator(patch_scores: jnp.ndarray, img_size=None) -> jnp.ndarray:
    """patch_scores: (N, 1, H, W) -> (N, H_out, W_out)  (or (N, W_out) if H_out == 1)."""
    n, c, h_in, w_in = patch_scores.shape
    assert c == 1, "Conv2d(1, 1, ...) requires a single input channel"

    if img_size is not None:
        h_out, w_out = int(img_size[0]), int(img_size[1])
    else:
        h_out, w_out = h_in, w_in
    w_out_pad = pl.cdiv(w_out, _LANE) * _LANE        # lane-dense output stores

    # Trace-time (numpy) fused upsample + pad + blur matrices -> no extra HBM arrays.
    b_row = _build_blur_matrix_np(h_out, h_in)                     # (H_out, H_in)
    b_col_t = np.zeros((w_in, w_out_pad), dtype=np.float32)
    b_col_t[:, :w_out] = _build_blur_matrix_np(w_out, w_in).T      # (W_in, W_out_pad)

    x = jnp.squeeze(patch_scores, axis=1)            # (N, H, W); metadata-only reshape
    if x.dtype != jnp.float32:
        x = x.astype(jnp.float32)

    # Pack several images per grid step (amortize per-step overhead), but keep
    # at least 2 grid steps when possible so both v7x TensorCores have work.
    per_img_bytes = 4 * (h_in * w_in + h_out * w_out_pad)
    bt = max(1, min(_MAX_BATCH_TILE, n, _TARGET_BLOCK_BYTES // max(per_img_bytes, 1)))
    if n >= 2:
        bt = min(bt, pl.cdiv(n, 2))
    n_pad = pl.cdiv(n, bt) * bt
    if n_pad != n:
        x = jnp.pad(x, ((0, n_pad - n), (0, 0), (0, 0)))

    # Merged column-blur matmul only when the in-kernel reshape is layout-free.
    merge_col = (bt > 1) and (h_in % 8 == 0)

    kernel = functools.partial(_blur_kernel, batch_tile=bt, merge_col=merge_col)
    blurred = pl.pallas_call(
        kernel,
        out_shape=jax.ShapeDtypeStruct((n_pad, h_out, w_out_pad), jnp.float32),
        grid_spec=pltpu.PrefetchScalarGridSpec(
            num_scalar_prefetch=0,
            grid=(n_pad // bt,),
            in_specs=[
                # Constant block index -> fetched once, not re-DMA'd per step.
                pl.BlockSpec((h_out, h_in), lambda b: (0, 0)),
                pl.BlockSpec((w_in, w_out_pad), lambda b: (0, 0)),
                pl.BlockSpec((bt, h_in, w_in), lambda b: (b, 0, 0)),
            ],
            out_specs=pl.BlockSpec((bt, h_out, w_out_pad), lambda b: (b, 0, 0)),
        ),
        compiler_params=pltpu.CompilerParams(
            dimension_semantics=("parallel",)),
    )(jnp.asarray(b_row), jnp.asarray(b_col_t), x)

    anomaly_map = blurred
    if n_pad != n or w_out_pad != w_out:
        anomaly_map = anomaly_map[:n, :, :w_out]
    # torch: .mean(axis=1) over the single channel is identity; .squeeze(axis=1)
    # only drops H when it equals 1.
    if anomaly_map.shape[1] == 1:
        anomaly_map = anomaly_map[:, 0]
    return anomaly_map


def _reference_numpy(patch_scores, img_size=None) -> np.ndarray:
    """float64 reference: nearest interpolate (PyTorch legacy) + dense 2-D cross-correlation."""
    x = np.asarray(patch_scores, dtype=np.float64)[:, 0]          # (N, H, W)
    if img_size is not None:
        h_out, w_out = int(img_size[0]), int(img_size[1])
        _, h, w = x.shape
        ri = np.minimum(np.floor(np.arange(h_out) * (h / h_out)).astype(np.int64), h - 1)
        ci = np.minimum(np.floor(np.arange(w_out) * (w / w_out)).astype(np.int64), w - 1)
        x = x[:, ri][:, :, ci]
    n, h, w = x.shape
    k1d = _gaussian_kernel1d_np(KS, SIGMA)
    k2d = np.outer(k1d, k1d)
    xpad = np.pad(x, ((0, 0), (PAD, PAD), (PAD, PAD)))
    out = np.zeros((n, h, w), dtype=np.float64)
    for i in range(KS):
        for j in range(KS):
            out += k2d[i, j] * xpad[:, i:i + h, j:j + w]
    return out


if __name__ == "__main__":
    key = jax.random.PRNGKey(0)

    # 1) blur only (no interpolation); batch packed 2-per-step -> merged-matmul path
    N, C, H, W = 4, 1, 16, 16
    patch_scores = jax.random.normal(key, (N, C, H, W), dtype=jnp.float32)
    out = jax.block_until_ready(anomaly_map_generator(patch_scores))
    assert out.shape == (N, H, W), out.shape
    np.testing.assert_allclose(np.asarray(out), _reference_numpy(patch_scores),
                               atol=1e-3, rtol=1e-3)

    # 2) fused nearest upsample + blur (non-square, non-integer scale)
    img_size = (24, 40)
    out2 = jax.block_until_ready(anomaly_map_generator(patch_scores, img_size=img_size))
    assert out2.shape == (N, img_size[0], img_size[1]), out2.shape
    np.testing.assert_allclose(np.asarray(out2), _reference_numpy(patch_scores, img_size),
                               atol=1e-3, rtol=1e-3)

    # 3) spatial dims not multiples of 8 -> per-batch fallback path
    patch_scores3 = jax.random.normal(jax.random.PRNGKey(0), (2, 1, 12, 20),
                                      dtype=jnp.float32)
    out3 = jax.block_until_ready(anomaly_map_generator(patch_scores3))
    assert out3.shape == (2, 12, 20), out3.shape
    np.testing.assert_allclose(np.asarray(out3), _reference_numpy(patch_scores3),
                               atol=1e-3, rtol=1e-3)

    print("KERNEL_OK")
</pallas_src>

<mosaic_0001>
module attributes {stable_mosaic.version = 11 : i64} {
  func.func @_blur_kernel(%arg0: i32, %arg1: memref<16x16xf32, #tpu.memory_space<vmem>>, %arg2: memref<16x128xf32, #tpu.memory_space<vmem>>, %arg3: memref<2x16x16xf32, #tpu.memory_space<vmem>>, %arg4: memref<2x16x128xf32, #tpu.memory_space<vmem>>) attributes {dimension_semantics = [#tpu.dimension_semantics<parallel>], iteration_bounds = array<i64: 2>, scalar_prefetch = 0 : i64, scratch_operands = 0 : i64, tpu.core_type = #tpu.core_type<tc>, window_params = [{pipeline_mode = #tpu.pipeline_mode<synchronous>, transform_indices = @transform_0, window_bounds = array<i64: 16, 16>}, {pipeline_mode = #tpu.pipeline_mode<synchronous>, transform_indices = @transform_1, window_bounds = array<i64: 16, 128>}, {transform_indices = @transform_2, window_bounds = array<i64: 2, 16, 16>}, {transform_indices = @transform_3, window_bounds = array<i64: 2, 16, 128>}]} {
    %c0 = arith.constant 0 : index
    %c0_0 = arith.constant 0 : index
    %0 = vector.load %arg1[%c0, %c0_0] : memref<16x16xf32, #tpu.memory_space<vmem>>, vector<16x16xf32>
    %c0_1 = arith.constant 0 : index
    %c0_2 = arith.constant 0 : index
    %1 = vector.load %arg2[%c0_1, %c0_2] : memref<16x128xf32, #tpu.memory_space<vmem>>, vector<16x128xf32>
    %c0_3 = arith.constant 0 : index
    %c0_4 = arith.constant 0 : index
    %c0_5 = arith.constant 0 : index
    %2 = vector.load %arg3[%c0_3, %c0_4, %c0_5] : memref<2x16x16xf32, #tpu.memory_space<vmem>>, vector<2x16x16xf32>
    %3 = vector.shape_cast %2 : vector<2x16x16xf32> to vector<32x16xf32>
    %cst = arith.constant dense<0.000000e+00> : vector<32x128xf32>
    %4 = tpu.matmul %3, %1, %cst {dimension_numbers = #tpu.dot_dimension_numbers<[1], [0], [0], [1], [0, 0, 1, 1], [], []>, precision = #tpu.contract_precision<fp32>} : vector<32x16xf32>, vector<16x128xf32>, vector<32x128xf32> -> vector<32x128xf32>
    %5 = vector.extract_strided_slice %4 {offsets = [0, 0], sizes = [16, 128], strides = [1, 1]} : vector<32x128xf32> to vector<16x128xf32>
    %cst_6 = arith.constant dense<0.000000e+00> : vector<16x128xf32>
    %6 = tpu.matmul %0, %5, %cst_6 {dimension_numbers = #tpu.dot_dimension_numbers<[1], [0], [0], [1], [0, 0, 1, 1], [], []>, precision = #tpu.contract_precision<fp32>} : vector<16x16xf32>, vector<16x128xf32>, vector<16x128xf32> -> vector<16x128xf32>
    %c0_7 = arith.constant 0 : index
    %c0_8 = arith.constant 0 : index
    %c0_9 = arith.constant 0 : index
    %7 = vector.load %arg4[%c0_7, %c0_8, %c0_9] : memref<2x16x128xf32, #tpu.memory_space<vmem>>, vector<1x16x128xf32>
    %8 = vector.shape_cast %7 : vector<1x16x128xf32> to vector<16x128xf32>
    %9 = vector.shape_cast %6 : vector<16x128xf32> to vector<1x16x128xf32>
    tpu.vector_store %arg4[%c0_7, %c0_8, %c0_9], %9 {strides = array<i32>} : memref<2x16x128xf32, #tpu.memory_space<vmem>>, vector<1x16x128xf32>,
    %10 = vector.extract_strided_slice %4 {offsets = [16, 0], sizes = [16, 128], strides = [1, 1]} : vector<32x128xf32> to vector<16x128xf32>
    %cst_10 = arith.constant dense<0.000000e+00> : vector<16x128xf32>
    %11 = tpu.matmul %0, %10, %cst_10 {dimension_numbers = #tpu.dot_dimension_numbers<[1], [0], [0], [1], [0, 0, 1, 1], [], []>, precision = #tpu.contract_precision<fp32>} : vector<16x16xf32>, vector<16x128xf32>, vector<16x128xf32> -> vector<16x128xf32>
    %c1 = arith.constant 1 : index
    %c0_11 = arith.constant 0 : index
    %c0_12 = arith.constant 0 : index
    %12 = vector.load %arg4[%c1, %c0_11, %c0_12] : memref<2x16x128xf32, #tpu.memory_space<vmem>>, vector<1x16x128xf32>
    %13 = vector.shape_cast %12 : vector<1x16x128xf32> to vector<16x128xf32>
    %14 = vector.shape_cast %11 : vector<16x128xf32> to vector<1x16x128xf32>
    tpu.vector_store %arg4[%c1, %c0_11, %c0_12], %14 {strides = array<i32>} : memref<2x16x128xf32, #tpu.memory_space<vmem>>, vector<1x16x128xf32>,
    return
  }
  func.func @transform_0(%arg0: i32) -> (i32, i32) {
    %c0_i32 = arith.constant 0 : i32
    %c0_i32_0 = arith.constant 0 : i32
    %c0_i32_1 = arith.constant 0 : i32
    return %c0_i32, %c0_i32_0 : i32, i32
  }
  func.func @transform_1(%arg0: i32) -> (i32, i32) {
    %c0_i32 = arith.constant 0 : i32
    %c0_i32_0 = arith.constant 0 : i32
    %c0_i32_1 = arith.constant 0 : i32
    return %c0_i32, %c0_i32_0 : i32, i32
  }
  func.func @transform_2(%arg0: i32) -> (i32, i32, i32) {
    %c0_i32 = arith.constant 0 : i32
    %c0_i32_0 = arith.constant 0 : i32
    %c0_i32_1 = arith.constant 0 : i32
    return %arg0, %c0_i32, %c0_i32_0 : i32, i32, i32
  }
  func.func @transform_3(%arg0: i32) -> (i32, i32, i32) {
    %c0_i32 = arith.constant 0 : i32
    %c0_i32_0 = arith.constant 0 : i32
    %c0_i32_1 = arith.constant 0 : i32
    return %arg0, %c0_i32, %c0_i32_0 : i32, i32, i32
  }
}

</mosaic_0001>

<llo_original>
// kernel: tpu_custom_call.1
$region0: #{tpu_custom_call.1}
  #allocation0 [shape = 'u32[]', space=smem, size = 0x4, offset = 0x4, fixed_abs, tag = 'smem constant byte address 0x4 - core index']
  #allocation1 [shape = 'u32[144,128]{1,0:T(1,128)}', space=vmem, size = 0x12000, scoped, tag = 'internal scratch']
  %s0 = inlined_call_operand.hbm [shape: f32[16,16], index: 0, kind: input, shape index: {}]
  %s1 = inlined_call_operand.hbm [shape: f32[16,128], index: 1, kind: input, shape index: {}]
  %s2 = inlined_call_operand.hbm [shape: f32[4,16,16], index: 2, kind: input, shape index: {}]
  %s3 = inlined_call_operand.hbm [shape: f32[4,16,128], index: 3, kind: output, shape index: {}]
  %s4 = sld [smem:[#allocation0]]
  $region57: #{tpu_custom_call.1} parent=0
    _
  %s6 = ssub.s32 1, %s4
  %s7 = scalar_select 0, %s6, %s4
  $region1: #{tpu_custom_call.1} parent=0
    #allocation2 [shape = 'u8[8192]{0}', space=vmem, size = 0x2000, scoped, tag = 'input window, operand 0, single buffered']
    #allocation3 [shape = 's32[2]{0}', space=sflag, size = 0x8, scoped, tag = 'scoped memory for tpu_custom_call.1']
    #allocation4 [shape = 's32[2]{0}', space=sflag, size = 0x8, scoped, tag = 'scoped memory for tpu_custom_call.1']
    #allocation5 [shape = 'u8[8192]{0}', space=vmem, size = 0x2000, scoped, tag = 'input window, operand 1, single buffered']
    #allocation6 [shape = 's32[1]{0}', space=sflag, size = 0x4, scoped, tag = 'scoped memory for tpu_custom_call.1']
    #allocation7 [shape = 'u8[32768]{0}', space=vmem, size = 0x8000, scoped, tag = 'input window, operand 2']
    #allocation8 [shape = 'u8[32768]{0}', space=vmem, size = 0x8000, scoped, tag = 'output window, operand 0']
    %8 = vsyncpa [#allocation3], 0
    %9 = vsyncpa [#allocation6], 0
    %10 = vsyncpa [#allocation4], 0
    %s11 = scalar_lea.sflag [#allocation4], 1
    %12 = vsyncpa %s11, 0
    loop: start=0, step=1, limit=4
    $region2: #{tpu_custom_call.1} parent=1 // loop_pre_header
      _
    $region3: #{tpu_custom_call.1} parent=1 // loop_header
      %s14 = sphi 0, %s18
      %p15 = scmp.ge.s32.totalorder %s14, 4
      %s22 = sphi 0, %s22
      %s24 = sphi 0, %s22
      %s25 = sphi 0, %s24
      %s39 = sphi 0, %s25
      %s43 = sphi 0, %s43
      %s45 = sphi 0, %s43
      %s46 = sphi 0, %s45
      %s60 = sphi 0, %s46
      %s66 = sphi 0, %s68
      %s69 = sphi 0, %s66
      %s70 = sphi 0, %s69
      %s86 = sphi 0, %s70
      %s92 = sphi 0, %s94
      %s95 = sphi 0, %s92
      %s96 = sphi 0, %s95
      %s112 = sphi 0, %s96
    $region4: #{tpu_custom_call.1} parent=1 // loop_header_branch
      %17 = sbr.rel (%p15) target = $region8
    $region5: #{tpu_custom_call.1} parent=1 // loop_body
      %s19 = ssub.s32 %s14, 1
      %s20 = ssub.s32 %s14, 2
      %s21 = sadd.s32 %s14, 1
      %s23 = sadd.s32 %s22, 1
      %p26 = scmp.eq.s32.totalorder %s14, 1
      %p27 = scmp.ne.s32.totalorder %s22, %s24
      %p28 = scmp.eq.s32.totalorder %s14, 0
      %p29 = por %p27, %p28
      %p30 = scmp.ne.s32.totalorder %s22, %s24
      %p31 = scmp.eq.s32.totalorder %s19, 1
      %p32 = por %p30, %p31
      %p33 = scmp.ne.s32.totalorder %s24, %s25
      %p34 = scmp.eq.s32.totalorder %s19, 0
      %p35 = por %p33, %p34
      %p36 = scmp.ne.s32.totalorder %s24, %s25
      %p37 = scmp.eq.s32.totalorder %s20, 1
      %p38 = por %p36, %p37
      %p40 = scmp.ne.s32.totalorder %s25, %s39
      %p41 = scmp.eq.s32.totalorder %s20, 0
      %p42 = por %p40, %p41
      %s44 = sadd.s32 %s43, 1
      %p47 = scmp.eq.s32.totalorder %s14, 1
      %p48 = scmp.ne.s32.totalorder %s43, %s45
      %p49 = scmp.eq.s32.totalorder %s14, 0
      %p50 = por %p48, %p49
      %p51 = scmp.ne.s32.totalorder %s43, %s45
      %p52 = scmp.eq.s32.totalorder %s19, 1
      %p53 = por %p51, %p52
      %p54 = scmp.ne.s32.totalorder %s45, %s46
      %p55 = scmp.eq.s32.totalorder %s19, 0
      %p56 = por %p54, %p55
      %p57 = scmp.ne.s32.totalorder %s45, %s46
      %p58 = scmp.eq.s32.totalorder %s20, 1
      %p59 = por %p57, %p58
      %p61 = scmp.ne.s32.totalorder %s46, %s60
      %p62 = scmp.eq.s32.totalorder %s20, 0
      %p63 = por %p61, %p62
      %s64 = ssub.s32 %s14, %s21
      %p65 = scmp.eq.s32.totalorder %s64, 0
      %s67 = sadd.s32 %s66, 1
      %s68 = scalar_select %p65, %s66, %s67
      %p71 = pneg %p65
      %p72 = scmp.eq.s32.totalorder %s14, 1
      %p73 = por %p71, %p72
      %p74 = scmp.ne.s32.totalorder %s66, %s69
      %p75 = scmp.eq.s32.totalorder %s14, 0
      %p76 = por %p74, %p75
      %p77 = scmp.ne.s32.totalorder %s66, %s69
      %p78 = scmp.eq.s32.totalorder %s19, 1
      %p79 = por %p77, %p78
      %p80 = scmp.ne.s32.totalorder %s69, %s70
      %p81 = scmp.eq.s32.totalorder %s19, 0
      %p82 = por %p80, %p81
      %p83 = scmp.ne.s32.totalorder %s69, %s70
      %p84 = scmp.eq.s32.totalorder %s20, 1
      %p85 = por %p83, %p84
      %p87 = scmp.ne.s32.totalorder %s70, %s86
      %p88 = scmp.eq.s32.totalorder %s20, 0
      %p89 = por %p87, %p88
      %s90 = ssub.s32 %s14, %s21
      %p91 = scmp.eq.s32.totalorder %s90, 0
      %s93 = sadd.s32 %s92, 1
      %s94 = scalar_select %p91, %s92, %s93
      %p97 = pneg %p91
      %p98 = scmp.eq.s32.totalorder %s14, 1
      %p99 = por %p97, %p98
      %p100 = scmp.ne.s32.totalorder %s92, %s95
      %p101 = scmp.eq.s32.totalorder %s14, 0
      %p102 = por %p100, %p101
      %p103 = scmp.ne.s32.totalorder %s92, %s95
      %p104 = scmp.eq.s32.totalorder %s19, 1
      %p105 = por %p103, %p104
      %p106 = scmp.ne.s32.totalorder %s95, %s96
      %p107 = scmp.eq.s32.totalorder %s19, 0
      %p108 = por %p106, %p107
      %p109 = scmp.ne.s32.totalorder %s95, %s96
      %p110 = scmp.eq.s32.totalorder %s20, 1
      %p111 = por %p109, %p110
      %p113 = scmp.ne.s32.totalorder %s96, %s112
      %p114 = scmp.eq.s32.totalorder %s20, 0
      %p115 = por %p113, %p114
      %p116 = scmp.le.s32.totalorder 1, %s14
      %p117 = scmp.lt.s32.totalorder %s14, 3
      %p118 = pnand %p116, %p117
      %p119 = pneg %p118
      // Predicated region
      $region9: #{tpu_custom_call.1} parent=5 // pred_check
        _
      $region10: #{tpu_custom_call.1} parent=5 // pred_check_branch
        %121 = sbr.rel (%p118) target = $region12
      $region11: #{tpu_custom_call.1} parent=5 // pred_region
        %s122 = ssub.s32 %s14, 1
        // Predicated region
        $region13: #{tpu_custom_call.1} parent=11 // pred_check
          %p123 = pneg %p35
        $region14: #{tpu_custom_call.1} parent=11 // pred_check_branch
          %125 = sbr.rel (%p123) target = $region16
        $region15: #{tpu_custom_call.1} parent=11 // pred_region
          %s127 = ssub.s32 256, 256
          %128 = vsyncadd [#allocation3], %s127
          %s129 = sshll.u32 [#allocation2], 4
          %s130 = int_to_ptr.vmem [resolvable:$true] %s129
          %135 = dma.hbm_to_vmem [thread:$0]  %s0, 256, %s130, [#allocation3], 128, 128, 8
        $region16: #{tpu_custom_call.1} parent=11 // pred_fallthru
          _
        // Predicated region
        $region17: #{tpu_custom_call.1} parent=11 // pred_check
          %p136 = pneg %p56
        $region18: #{tpu_custom_call.1} parent=11 // pred_check_branch
          %138 = sbr.rel (%p136) target = $region20
        $region19: #{tpu_custom_call.1} parent=11 // pred_region
          %s140 = ssub.s32 256, 256
          %141 = vsyncadd [#allocation6], %s140
          %s142 = sshll.u32 [#allocation5], 4
          %s143 = int_to_ptr.vmem [resolvable:$true] %s142
          %148 = dma.hbm_to_vmem [thread:$0]  %s1, 256, %s143, [#allocation6], 128, 128, 8
        $region20: #{tpu_custom_call.1} parent=11 // pred_fallthru
          _
      $region12: #{tpu_custom_call.1} parent=5 // pred_fallthru
        _
      %p149 = scmp.lt.s32.totalorder %s14, 2
      // Predicated region
      $region21: #{tpu_custom_call.1} parent=5 // pred_check
        %p150 = pneg %p149
      $region22: #{tpu_custom_call.1} parent=5 // pred_check_branch
        %152 = sbr.rel (%p150) target = $region24
      $region23: #{tpu_custom_call.1} parent=5 // pred_region
        // Predicated region
        $region25: #{tpu_custom_call.1} parent=23 // pred_check
          %p153 = pneg %p76
        $region26: #{tpu_custom_call.1} parent=23 // pred_check_branch
          %155 = sbr.rel (%p153) target = $region28
        $region27: #{tpu_custom_call.1} parent=23 // pred_region
          %s156 = sand.u32 %s14, 1
          %s157 = scalar_lea.sflag [#allocation3], %s156
          %s158 = sand.u32 %s66, 1
          %s159 = smul.addr %s158, 32
          %s160 = scalar_lea.vmem [#allocation7], %s159
          %s161 = smul.u32 2, %s14
          %s163 = ssub.s32 512, 512
          %164 = vsyncadd %s157, %s163
          %s165 = smul.addr %s161, 2
          %s166 = smul.addr %s165, 128
          %s167 = scalar_lea.hbm %s2, %s166
          %s168 = sshll.u32 %s160, 4
          %s169 = int_to_ptr.vmem [resolvable:$true] %s168
          %174 = dma.hbm_to_vmem [thread:$0]  %s167, 512, %s169, %s157, 128, 128, 8
        $region28: #{tpu_custom_call.1} parent=23 // pred_fallthru
          _
      $region24: #{tpu_custom_call.1} parent=5 // pred_fallthru
        _
      %p175 = scmp.le.s32.totalorder 1, %s14
      %p176 = scmp.lt.s32.totalorder %s14, 3
      %p177 = pnand %p175, %p176
      %p178 = pneg %p177
      // Predicated region
      $region29: #{tpu_custom_call.1} parent=5 // pred_check
        _
      $region30: #{tpu_custom_call.1} parent=5 // pred_check_branch
        %180 = sbr.rel (%p177) target = $region32
      $region31: #{tpu_custom_call.1} parent=5 // pred_region
        %s181 = ssub.s32 %s14, 1
        // Predicated region
        $region33: #{tpu_custom_call.1} parent=31 // pred_check
          %p182 = pneg %p35
        $region34: #{tpu_custom_call.1} parent=31 // pred_check_branch
          %184 = sbr.rel (%p182) target = $region36
        $region35: #{tpu_custom_call.1} parent=31 // pred_region
          %185 = dma.done [#allocation3], 256
        $region36: #{tpu_custom_call.1} parent=31 // pred_fallthru
          _
        // Predicated region
        $region37: #{tpu_custom_call.1} parent=31 // pred_check
          %p186 = pneg %p56
        $region38: #{tpu_custom_call.1} parent=31 // pred_check_branch
          %188 = sbr.rel (%p186) target = $region40
        $region39: #{tpu_custom_call.1} parent=31 // pred_region
          %189 = dma.done [#allocation6], 256
        $region40: #{tpu_custom_call.1} parent=31 // pred_fallthru
          _
        %s190 = sand.u32 %s19, 1
        %s191 = scalar_lea.sflag [#allocation3], %s190
        %s192 = sand.u32 %s69, 1
        %s193 = smul.addr %s192, 32
        %s194 = scalar_lea.vmem [#allocation7], %s193
        // Predicated region
        $region41: #{tpu_custom_call.1} parent=31 // pred_check
          %p195 = pneg %p82
        $region42: #{tpu_custom_call.1} parent=31 // pred_check_branch
          %197 = sbr.rel (%p195) target = $region44
        $region43: #{tpu_custom_call.1} parent=31 // pred_region
          %198 = dma.done %s191, 512
        $region44: #{tpu_custom_call.1} parent=31 // pred_fallthru
          _
        %p199 = pneg %p35
        %p200 = pneg %p32
        %p201 = pneg %p56
        %p202 = pneg %p53
        %s203 = sand.u32 %s19, 1
        %s204 = scalar_lea.sflag [#allocation3], %s203
        %s205 = sand.u32 %s69, 1
        %s206 = smul.addr %s205, 32
        %s207 = scalar_lea.vmem [#allocation7], %s206
        %p208 = pneg %p82
        %p209 = pneg %p79
        %p210 = pneg %p108
        %p211 = pneg %p105
        %s212 = sand.u32 %s95, 1
        %s213 = scalar_lea.sflag [#allocation4], %s212
        %s214 = sand.u32 %s95, 1
        %s215 = smul.addr %s214, 32
        %s216 = scalar_lea.vmem [#allocation8], %s215
        %s217 = smul.u32 2, %s19
        %s218 = smul.u32 2, %s19
        %v219 = vld [vmem:[#allocation2] sm:$0xff]
        %v220 = vld [vmem:[#allocation2 + $0x8] sm:$0xff]
        %v221 = vld [vmem:[#allocation5] sm:$0xff]
        %v222 = vld [vmem:[#allocation5 + $0x8] sm:$0xff]
        %v223 = vld [vmem:[%s194] sm:$0xff]
        %v224 = vld [vmem:[%s194 + $0x8] sm:$0xff]
        %v225 = vld [vmem:[%s194 + $0x10] sm:$0xff]
        %v226 = vld [vmem:[%s194 + $0x18] sm:$0xff]
        %vm227 = vcmask 130048
        %v229 = vsel %vm227, %v223, 0
        %v232 = vsel %vm227, %v224, 0
        %v235 = vsel %vm227, %v225, 0
        %v238 = vsel %vm227, %v226, 0
        %240 = vmatprep.subr.mxu0 0.0
        %v241 = vand.u32 %v221, 4294901760
        %242 = vmatpush1.msra.mxu0 %v241
        %243 = vmatprep.subr.mxu0 0.0
        %v244 = vand.u32 %v222, 4294901760
        %245 = vmatpush1.msra.mxu0 %v244
        %246 = vmatprep.subr.mxu0 0.0
        %247 = vmatpush1.msra.mxu0 0.0
        %248 = vmatprep.subr.mxu0 0.0
        %249 = vmatpush1.msra.mxu0 0.0
        %250 = vmatprep.subr.mxu0 0.0
        %251 = vmatpush1.msra.mxu0 0.0
        %252 = vmatprep.subr.mxu0 0.0
        %253 = vmatpush1.msra.mxu0 0.0
        %254 = vmatprep.subr.mxu0 0.0
        %255 = vmatpush1.msra.mxu0 0.0
        %256 = vmatprep.subr.mxu0 0.0
        %257 = vmatpush1.msra.mxu0 0.0
        %258 = vmatprep.subr.mxu0 0.0
        %259 = vmatpush1.msra.mxu0 0.0
        %260 = vmatprep.subr.mxu0 0.0
        %261 = vmatpush1.msra.mxu0 0.0
        %262 = vmatprep.subr.mxu0 0.0
        %263 = vmatpush1.msra.mxu0 0.0
        %264 = vmatprep.subr.mxu0 0.0
        %265 = vmatpush1.msra.mxu0 0.0
        %266 = vmatprep.subr.mxu0 0.0
        %267 = vmatpush1.msra.mxu0 0.0
        %268 = vmatprep.subr.mxu0 0.0
        %269 = vmatpush1.msra.mxu0 0.0
        %270 = vmatprep.subr.mxu0 0.0
        %271 = vmatpush1.msra.mxu0 0.0
        %272 = vmatprep.subr.mxu0 0.0
        %273 = vmatpush1.msra.mxu0 0.0
        %274 = vmatprep.subr.mxu0 0.0
        %275 = vmatpush1.msra.mxu0 0.0
        %276 = vmatprep.subr.mxu0 0.0
        %277 = vmatpush1.msra.mxu0 0.0
        %278 = vmatprep.subr.mxu0 0.0
        %279 = vmatpush1.msra.mxu0 0.0
        %280 = vmatprep.subr.mxu0 0.0
        %281 = vmatpush1.msra.mxu0 0.0
        %282 = vmatprep.subr.mxu0 0.0
        %283 = vmatpush1.msra.mxu0 0.0
        %284 = vmatprep.subr.mxu0 0.0
        %285 = vmatpush1.msra.mxu0 0.0
        %286 = vmatprep.subr.mxu0 0.0
        %287 = vmatpush1.msra.mxu0 0.0
        %288 = vmatprep.subr.mxu0 0.0
        %289 = vmatpush1.msra.mxu0 0.0
        %290 = vmatprep.subr.mxu0 0.0
        %291 = vmatpush1.msra.mxu0 0.0
        %292 = vmatprep.subr.mxu0 0.0
        %293 = vmatpush1.msra.mxu0 0.0
        %294 = vmatprep.subr.mxu0 0.0
        %295 = vmatpush1.msra.mxu0 0.0
        %296 = vmatprep.subr.mxu0 0.0
        %297 = vmatpush1.msra.mxu0 0.0
        %298 = vmatprep.subr.mxu0 0.0
        %299 = vmatpush1.msra.mxu0 0.0
        %300 = vmatprep.subr.mxu0 0.0
        %301 = vmatpush1.msra.mxu0 0.0
        %302 = vmatprep.subr.mxu0 0.0
        %303 = vmatpush1.msra.mxu0 0.0
        %304 = vmatprep.subr.mxu0 0.0
        %305 = vmatpush1.msra.mxu0 0.0
        %306 = vmatprep.mubr.f32.mxu0 0.0
        %v307 = vand.u32 %v229, 4294901760
        %v308 = vsub.f32 %v229, %v307
        %v309 = vand.u32 %v308, 4294901760
        %v310 = vsub.f32 %v308, %v309
        %v311 = vand.u32 %v310, 4294901760
        %312 = vmatmul.mubr.f32.gmra.mrb[0].mxu0 %v311
        %v313 = vpop.f32.mrb[0].mxu0
        %v314 = vadd.f32 0.0, %v313
        %v315 = vpop.f32.mrb[0].mxu0
        %316 = vmatprep.mubr.f32.mxu0 0.0
        %v317 = vand.u32 %v232, 4294901760
        %v318 = vsub.f32 %v232, %v317
        %v319 = vand.u32 %v318, 4294901760
        %v320 = vsub.f32 %v318, %v319
        %v321 = vand.u32 %v320, 4294901760
        %322 = vmatmul.mubr.f32.gmra.mrb[0].mxu0 %v321
        %v323 = vpop.f32.mrb[0].mxu0
        %v324 = vadd.f32 0.0, %v323
        %v325 = vpop.f32.mrb[0].mxu0
        %326 = vmatprep.mubr.f32.mxu0 0.0
        %v327 = vand.u32 %v235, 4294901760
        %v328 = vsub.f32 %v235, %v327
        %v329 = vand.u32 %v328, 4294901760
        %v330 = vsub.f32 %v328, %v329
        %v331 = vand.u32 %v330, 4294901760
        %332 = vmatmul.mubr.f32.gmra.mrb[0].mxu0 %v331
        %v333 = vpop.f32.mrb[0].mxu0
        %v334 = vadd.f32 0.0, %v333
        %v335 = vpop.f32.mrb[0].mxu0
        %336 = vmatprep.mubr.f32.mxu0 0.0
        %v337 = vand.u32 %v238, 4294901760
        %v338 = vsub.f32 %v238, %v337
        %v339 = vand.u32 %v338, 4294901760
        %v340 = vsub.f32 %v338, %v339
        %v341 = vand.u32 %v340, 4294901760
        %342 = vmatmul.mubr.f32.gmra.mrb[0].mxu0 %v341
        %v343 = vpop.f32.mrb[0].mxu0
        %v344 = vadd.f32 0.0, %v343
        %v345 = vpop.f32.mrb[0].mxu0
        %346 = vdwg.mxu0
        %347 = vmatprep.subr.mxu0 0.0
        %v348 = vand.u32 %v221, 4294901760
        %v349 = vsub.f32 %v221, %v348
        %v350 = vand.u32 %v349, 4294901760
        %v351 = vsub.f32 %v349, %v350
        %v352 = vand.u32 %v351, 4294901760
        %353 = vmatpush1.msra.mxu0 %v352
        %354 = vmatprep.subr.mxu0 0.0
        %v355 = vand.u32 %v222, 4294901760
        %v356 = vsub.f32 %v222, %v355
        %v357 = vand.u32 %v356, 4294901760
        %v358 = vsub.f32 %v356, %v357
        %v359 = vand.u32 %v358, 4294901760
        %360 = vmatpush1.msra.mxu0 %v359
        %361 = vmatprep.subr.mxu0 0.0
        %362 = vmatpush1.msra.mxu0 0.0
        %363 = vmatprep.subr.mxu0 0.0
        %364 = vmatpush1.msra.mxu0 0.0
        %365 = vmatprep.subr.mxu0 0.0
        %366 = vmatpush1.msra.mxu0 0.0
        %367 = vmatprep.subr.mxu0 0.0
        %368 = vmatpush1.msra.mxu0 0.0
        %369 = vmatprep.subr.mxu0 0.0
        %370 = vmatpush1.msra.mxu0 0.0
        %371 = vmatprep.subr.mxu0 0.0
        %372 = vmatpush1.msra.mxu0 0.0
        %373 = vmatprep.subr.mxu0 0.0
        %374 = vmatpush1.msra.mxu0 0.0
        %375 = vmatprep.subr.mxu0 0.0
        %376 = vmatpush1.msra.mxu0 0.0
        %377 = vmatprep.subr.mxu0 0.0
        %378 = vmatpush1.msra.mxu0 0.0
        %379 = vmatprep.subr.mxu0 0.0
        %380 = vmatpush1.msra.mxu0 0.0
        %381 = vmatprep.subr.mxu0 0.0
        %382 = vmatpush1.msra.mxu0 0.0
        %383 = vmatprep.subr.mxu0 0.0
        %384 = vmatpush1.msra.mxu0 0.0
        %385 = vmatprep.subr.mxu0 0.0
        %386 = vmatpush1.msra.mxu0 0.0
        %387 = vmatprep.subr.mxu0 0.0
        %388 = vmatpush1.msra.mxu0 0.0
        %389 = vmatprep.subr.mxu0 0.0
        %390 = vmatpush1.msra.mxu0 0.0
        %391 = vmatprep.subr.mxu0 0.0
        %392 = vmatpush1.msra.mxu0 0.0
        %393 = vmatprep.subr.mxu0 0.0
        %394 = vmatpush1.msra.mxu0 0.0
        %395 = vmatprep.subr.mxu0 0.0
        %396 = vmatpush1.msra.mxu0 0.0
        %397 = vmatprep.subr.mxu0 0.0
        %398 = vmatpush1.msra.mxu0 0.0
        %399 = vmatprep.subr.mxu0 0.0
        %400 = vmatpush1.msra.mxu0 0.0
        %401 = vmatprep.subr.mxu0 0.0
        %402 = vmatpush1.msra.mxu0 0.0
        %403 = vmatprep.subr.mxu0 0.0
        %404 = vmatpush1.msra.mxu0 0.0
        %405 = vmatprep.subr.mxu0 0.0
        %406 = vmatpush1.msra.mxu0 0.0
        %407 = vmatprep.subr.mxu0 0.0
        %408 = vmatpush1.msra.mxu0 0.0
        %409 = vmatprep.subr.mxu0 0.0
        %410 = vmatpush1.msra.mxu0 0.0
        %411 = vmatprep.subr.mxu0 0.0
        %412 = vmatpush1.msra.mxu0 0.0
        %413 = vmatprep.subr.mxu0 0.0
        %414 = vmatpush1.msra.mxu0 0.0
        %415 = vmatprep.subr.mxu0 0.0
        %416 = vmatpush1.msra.mxu0 0.0
        %417 = vmatprep.subr.mxu0 0.0
        %418 = vmatpush1.msra.mxu0 0.0
        %419 = vmatprep.subr.mxu0 0.0
        %420 = vmatpush1.msra.mxu0 0.0
        %421 = vmatprep.mubr.f32.mxu0 0.0
        %v422 = vand.u32 %v229, 4294901760
        %423 = vmatmul.mubr.f32.gmra.mrb[0].mxu0 %v422
        %v424 = vpop.f32.mrb[0].mxu0
        %v425 = vadd.f32 %v314, %v424
        %v426 = vpop.f32.mrb[0].mxu0
        %427 = vmatprep.mubr.f32.mxu0 0.0
        %v428 = vand.u32 %v232, 4294901760
        %429 = vmatmul.mubr.f32.gmra.mrb[0].mxu0 %v428
        %v430 = vpop.f32.mrb[0].mxu0
        %v431 = vadd.f32 %v324, %v430
        %v432 = vpop.f32.mrb[0].mxu0
        %433 = vmatprep.mubr.f32.mxu0 0.0
        %v434 = vand.u32 %v235, 4294901760
        %435 = vmatmul.mubr.f32.gmra.mrb[0].mxu0 %v434
        %v436 = vpop.f32.mrb[0].mxu0
        %v437 = vadd.f32 %v334, %v436
        %v438 = vpop.f32.mrb[0].mxu0
        %439 = vmatprep.mubr.f32.mxu0 0.0
        %v440 = vand.u32 %v238, 4294901760
        %441 = vmatmul.mubr.f32.gmra.mrb[0].mxu0 %v440
        %v442 = vpop.f32.mrb[0].mxu0
        %v443 = vadd.f32 %v344, %v442
        %v444 = vpop.f32.mrb[0].mxu0
        %445 = vdwg.mxu0
        %446 = vmatprep.subr.mxu0 0.0
        %v447 = vand.u32 %v221, 4294901760
        %v448 = vsub.f32 %v221, %v447
        %449 = vmatpush1.msra.mxu0 %v448
        %450 = vmatprep.subr.mxu0 0.0
        %v451 = vand.u32 %v222, 4294901760
        %v452 = vsub.f32 %v222, %v451
        %453 = vmatpush1.msra.mxu0 %v452
        %454 = vmatprep.subr.mxu0 0.0
        %455 = vmatpush1.msra.mxu0 0.0
        %456 = vmatprep.subr.mxu0 0.0
        %457 = vmatpush1.msra.mxu0 0.0
        %458 = vmatprep.subr.mxu0 0.0
        %459 = vmatpush1.msra.mxu0 0.0
        %460 = vmatprep.subr.mxu0 0.0
        %461 = vmatpush1.msra.mxu0 0.0
        %462 = vmatprep.subr.mxu0 0.0
        %463 = vmatpush1.msra.mxu0 0.0
        %464 = vmatprep.subr.mxu0 0.0
        %465 = vmatpush1.msra.mxu0 0.0
        %466 = vmatprep.subr.mxu0 0.0
        %467 = vmatpush1.msra.mxu0 0.0
        %468 = vmatprep.subr.mxu0 0.0
        %469 = vmatpush1.msra.mxu0 0.0
        %470 = vmatprep.subr.mxu0 0.0
        %471 = vmatpush1.msra.mxu0 0.0
        %472 = vmatprep.subr.mxu0 0.0
        %473 = vmatpush1.msra.mxu0 0.0
        %474 = vmatprep.subr.mxu0 0.0
        %475 = vmatpush1.msra.mxu0 0.0
        %476 = vmatprep.subr.mxu0 0.0
        %477 = vmatpush1.msra.mxu0 0.0
        %478 = vmatprep.subr.mxu0 0.0
        %479 = vmatpush1.msra.mxu0 0.0
        %480 = vmatprep.subr.mxu0 0.0
        %481 = vmatpush1.msra.mxu0 0.0
        %482 = vmatprep.subr.mxu0 0.0
        %483 = vmatpush1.msra.mxu0 0.0
        %484 = vmatprep.subr.mxu0 0.0
        %485 = vmatpush1.msra.mxu0 0.0
        %486 = vmatprep.subr.mxu0 0.0
        %487 = vmatpush1.msra.mxu0 0.0
        %488 = vmatprep.subr.mxu0 0.0
        %489 = vmatpush1.msra.mxu0 0.0
        %490 = vmatprep.subr.mxu0 0.0
        %491 = vmatpush1.msra.mxu0 0.0
        %492 = vmatprep.subr.mxu0 0.0
        %493 = vmatpush1.msra.mxu0 0.0
        %494 = vmatprep.subr.mxu0 0.0
        %495 = vmatpush1.msra.mxu0 0.0
        %496 = vmatprep.subr.mxu0 0.0
        %497 = vmatpush1.msra.mxu0 0.0
        %498 = vmatprep.subr.mxu0 0.0
        %499 = vmatpush1.msra.mxu0 0.0
        %500 = vmatprep.subr.mxu0 0.0
        %501 = vmatpush1.msra.mxu0 0.0
        %502 = vmatprep.subr.mxu0 0.0
        %503 = vmatpush1.msra.mxu0 0.0
        %504 = vmatprep.subr.mxu0 0.0
        %505 = vmatpush1.msra.mxu0 0.0
        %506 = vmatprep.subr.mxu0 0.0
        %507 = vmatpush1.msra.mxu0 0.0
        %508 = vmatprep.subr.mxu0 0.0
        %509 = vmatpush1.msra.mxu0 0.0
        %510 = vmatprep.subr.mxu0 0.0
        %511 = vmatpush1.msra.mxu0 0.0
        %512 = vmatprep.subr.mxu0 0.0
        %513 = vmatpush1.msra.mxu0 0.0
        %514 = vmatprep.mubr.f32.mxu0 0.0
        %v515 = vand.u32 %v229, 4294901760
        %v516 = vsub.f32 %v229, %v515
        %517 = vmatmul.mubr.f32.gmra.mrb[0].mxu0 %v516
        %v518 = vpop.f32.mrb[0].mxu0
        %v519 = vadd.f32 %v425, %v518
        %v520 = vpop.f32.mrb[0].mxu0
        %521 = vmatprep.mubr.f32.mxu0 0.0
        %v522 = vand.u32 %v232, 4294901760
        %v523 = vsub.f32 %v232, %v522
        %524 = vmatmul.mubr.f32.gmra.mrb[0].mxu0 %v523
        %v525 = vpop.f32.mrb[0].mxu0
        %v526 = vadd.f32 %v431, %v525
        %v527 = vpop.f32.mrb[0].mxu0
        %528 = vmatprep.mubr.f32.mxu0 0.0
        %v529 = vand.u32 %v235, 4294901760
        %v530 = vsub.f32 %v235, %v529
        %531 = vmatmul.mubr.f32.gmra.mrb[0].mxu0 %v530
        %v532 = vpop.f32.mrb[0].mxu0
        %v533 = vadd.f32 %v437, %v532
        %v534 = vpop.f32.mrb[0].mxu0
        %535 = vmatprep.mubr.f32.mxu0 0.0
        %v536 = vand.u32 %v238, 4294901760
        %v537 = vsub.f32 %v238, %v536
        %538 = vmatmul.mubr.f32.gmra.mrb[0].mxu0 %v537
        %v539 = vpop.f32.mrb[0].mxu0
        %v540 = vadd.f32 %v443, %v539
        %v541 = vpop.f32.mrb[0].mxu0
        %542 = vdwg.mxu0
        %543 = vmatprep.subr.mxu0 0.0
        %v544 = vand.u32 %v221, 4294901760
        %545 = vmatpush1.msra.mxu0 %v544
        %546 = vmatprep.subr.mxu0 0.0
        %v547 = vand.u32 %v222, 4294901760
        %548 = vmatpush1.msra.mxu0 %v547
        %549 = vmatprep.subr.mxu0 0.0
        %550 = vmatpush1.msra.mxu0 0.0
        %551 = vmatprep.subr.mxu0 0.0
        %552 = vmatpush1.msra.mxu0 0.0
        %553 = vmatprep.subr.mxu0 0.0
        %554 = vmatpush1.msra.mxu0 0.0
        %555 = vmatprep.subr.mxu0 0.0
        %556 = vmatpush1.msra.mxu0 0.0
        %557 = vmatprep.subr.mxu0 0.0
        %558 = vmatpush1.msra.mxu0 0.0
        %559 = vmatprep.subr.mxu0 0.0
        %560 = vmatpush1.msra.mxu0 0.0
        %561 = vmatprep.subr.mxu0 0.0
        %562 = vmatpush1.msra.mxu0 0.0
        %563 = vmatprep.subr.mxu0 0.0
        %564 = vmatpush1.msra.mxu0 0.0
        %565 = vmatprep.subr.mxu0 0.0
        %566 = vmatpush1.msra.mxu0 0.0
        %567 = vmatprep.subr.mxu0 0.0
        %568 = vmatpush1.msra.mxu0 0.0
        %569 = vmatprep.subr.mxu0 0.0
        %570 = vmatpush1.msra.mxu0 0.0
        %571 = vmatprep.subr.mxu0 0.0
        %572 = vmatpush1.msra.mxu0 0.0
        %573 = vmatprep.subr.mxu0 0.0
        %574 = vmatpush1.msra.mxu0 0.0
        %575 = vmatprep.subr.mxu0 0.0
        %576 = vmatpush1.msra.mxu0 0.0
        %577 = vmatprep.subr.mxu0 0.0
        %578 = vmatpush1.msra.mxu0 0.0
        %579 = vmatprep.subr.mxu0 0.0
        %580 = vmatpush1.msra.mxu0 0.0
        %581 = vmatprep.subr.mxu0 0.0
        %582 = vmatpush1.msra.mxu0 0.0
        %583 = vmatprep.subr.mxu0 0.0
        %584 = vmatpush1.msra.mxu0 0.0
        %585 = vmatprep.subr.mxu0 0.0
        %586 = vmatpush1.msra.mxu0 0.0
        %587 = vmatprep.subr.mxu0 0.0
        %588 = vmatpush1.msra.mxu0 0.0
        %589 = vmatprep.subr.mxu0 0.0
        %590 = vmatpush1.msra.mxu0 0.0
        %591 = vmatprep.subr.mxu0 0.0
        %592 = vmatpush1.msra.mxu0 0.0
        %593 = vmatprep.subr.mxu0 0.0
        %594 = vmatpush1.msra.mxu0 0.0
        %595 = vmatprep.subr.mxu0 0.0
        %596 = vmatpush1.msra.mxu0 0.0
        %597 = vmatprep.subr.mxu0 0.0
        %598 = vmatpush1.msra.mxu0 0.0
        %599 = vmatprep.subr.mxu0 0.0
        %600 = vmatpush1.msra.mxu0 0.0
        %601 = vmatprep.subr.mxu0 0.0
        %602 = vmatpush1.msra.mxu0 0.0
        %603 = vmatprep.subr.mxu0 0.0
        %604 = vmatpush1.msra.mxu0 0.0
        %605 = vmatprep.subr.mxu0 0.0
        %606 = vmatpush1.msra.mxu0 0.0
        %607 = vmatprep.subr.mxu0 0.0
        %608 = vmatpush1.msra.mxu0 0.0
        %609 = vmatprep.mubr.f32.mxu0 0.0
        %v610 = vand.u32 %v229, 4294901760
        %v611 = vsub.f32 %v229, %v610
        %v612 = vand.u32 %v611, 4294901760
        %613 = vmatmul.mubr.f32.gmra.mrb[0].mxu0 %v612
        %v614 = vpop.f32.mrb[0].mxu0
        %v615 = vadd.f32 %v519, %v614
        %v616 = vpop.f32.mrb[0].mxu0
        %617 = vmatprep.mubr.f32.mxu0 0.0
        %v618 = vand.u32 %v232, 4294901760
        %v619 = vsub.f32 %v232, %v618
        %v620 = vand.u32 %v619, 4294901760
        %621 = vmatmul.mubr.f32.gmra.mrb[0].mxu0 %v620
        %v622 = vpop.f32.mrb[0].mxu0
        %v623 = vadd.f32 %v526, %v622
        %v624 = vpop.f32.mrb[0].mxu0
        %625 = vmatprep.mubr.f32.mxu0 0.0
        %v626 = vand.u32 %v235, 4294901760
        %v627 = vsub.f32 %v235, %v626
        %v628 = vand.u32 %v627, 4294901760
        %629 = vmatmul.mubr.f32.gmra.mrb[0].mxu0 %v628
        %v630 = vpop.f32.mrb[0].mxu0
        %v631 = vadd.f32 %v533, %v630
        %v632 = vpop.f32.mrb[0].mxu0
        %633 = vmatprep.mubr.f32.mxu0 0.0
        %v634 = vand.u32 %v238, 4294901760
        %v635 = vsub.f32 %v238, %v634
        %v636 = vand.u32 %v635, 4294901760
        %637 = vmatmul.mubr.f32.gmra.mrb[0].mxu0 %v636
        %v638 = vpop.f32.mrb[0].mxu0
        %v639 = vadd.f32 %v540, %v638
        %v640 = vpop.f32.mrb[0].mxu0
        %641 = vdwg.mxu0
        %642 = vmatprep.subr.mxu0 0.0
        %v643 = vand.u32 %v221, 4294901760
        %v644 = vsub.f32 %v221, %v643
        %v645 = vand.u32 %v644, 4294901760
        %646 = vmatpush1.msra.mxu0 %v645
        %647 = vmatprep.subr.mxu0 0.0
        %v648 = vand.u32 %v222, 4294901760
        %v649 = vsub.f32 %v222, %v648
        %v650 = vand.u32 %v649, 4294901760
        %651 = vmatpush1.msra.mxu0 %v650
        %652 = vmatprep.subr.mxu0 0.0
        %653 = vmatpush1.msra.mxu0 0.0
        %654 = vmatprep.subr.mxu0 0.0
        %655 = vmatpush1.msra.mxu0 0.0
        %656 = vmatprep.subr.mxu0 0.0
        %657 = vmatpush1.msra.mxu0 0.0
        %658 = vmatprep.subr.mxu0 0.0
        %659 = vmatpush1.msra.mxu0 0.0
        %660 = vmatprep.subr.mxu0 0.0
        %661 = vmatpush1.msra.mxu0 0.0
        %662 = vmatprep.subr.mxu0 0.0
        %663 = vmatpush1.msra.mxu0 0.0
        %664 = vmatprep.subr.mxu0 0.0
        %665 = vmatpush1.msra.mxu0 0.0
        %666 = vmatprep.subr.mxu0 0.0
        %667 = vmatpush1.msra.mxu0 0.0
        %668 = vmatprep.subr.mxu0 0.0
        %669 = vmatpush1.msra.mxu0 0.0
        %670 = vmatprep.subr.mxu0 0.0
        %671 = vmatpush1.msra.mxu0 0.0
        %672 = vmatprep.subr.mxu0 0.0
        %673 = vmatpush1.msra.mxu0 0.0
        %674 = vmatprep.subr.mxu0 0.0
        %675 = vmatpush1.msra.mxu0 0.0
        %676 = vmatprep.subr.mxu0 0.0
        %677 = vmatpush1.msra.mxu0 0.0
        %678 = vmatprep.subr.mxu0 0.0
        %679 = vmatpush1.msra.mxu0 0.0
        %680 = vmatprep.subr.mxu0 0.0
        %681 = vmatpush1.msra.mxu0 0.0
        %682 = vmatprep.subr.mxu0 0.0
        %683 = vmatpush1.msra.mxu0 0.0
        %684 = vmatprep.subr.mxu0 0.0
        %685 = vmatpush1.msra.mxu0 0.0
        %686 = vmatprep.subr.mxu0 0.0
        %687 = vmatpush1.msra.mxu0 0.0
        %688 = vmatprep.subr.mxu0 0.0
        %689 = vmatpush1.msra.mxu0 0.0
        %690 = vmatprep.subr.mxu0 0.0
        %691 = vmatpush1.msra.mxu0 0.0
        %692 = vmatprep.subr.mxu0 0.0
        %693 = vmatpush1.msra.mxu0 0.0
        %694 = vmatprep.subr.mxu0 0.0
        %695 = vmatpush1.msra.mxu0 0.0
        %696 = vmatprep.subr.mxu0 0.0
        %697 = vmatpush1.msra.mxu0 0.0
        %698 = vmatprep.subr.mxu0 0.0
        %699 = vmatpush1.msra.mxu0 0.0
        %700 = vmatprep.subr.mxu0 0.0
        %701 = vmatpush1.msra.mxu0 0.0
        %702 = vmatprep.subr.mxu0 0.0
        %703 = vmatpush1.msra.mxu0 0.0
        %704 = vmatprep.subr.mxu0 0.0
        %705 = vmatpush1.msra.mxu0 0.0
        %706 = vmatprep.subr.mxu0 0.0
        %707 = vmatpush1.msra.mxu0 0.0
        %708 = vmatprep.subr.mxu0 0.0
        %709 = vmatpush1.msra.mxu0 0.0
        %710 = vmatprep.subr.mxu0 0.0
        %711 = vmatpush1.msra.mxu0 0.0
        %712 = vmatprep.mubr.f32.mxu0 0.0
        %v713 = vand.u32 %v229, 4294901760
        %714 = vmatmul.mubr.f32.gmra.mrb[0].mxu0 %v713
        %v715 = vpop.f32.mrb[0].mxu0
        %v716 = vadd.f32 %v615, %v715
        %v717 = vpop.f32.mrb[0].mxu0
        %718 = vmatprep.mubr.f32.mxu0 0.0
        %v719 = vand.u32 %v232, 4294901760
        %720 = vmatmul.mubr.f32.gmra.mrb[0].mxu0 %v719
        %v721 = vpop.f32.mrb[0].mxu0
        %v722 = vadd.f32 %v623, %v721
        %v723 = vpop.f32.mrb[0].mxu0
        %724 = vmatprep.mubr.f32.mxu0 0.0
        %v725 = vand.u32 %v235, 4294901760
        %726 = vmatmul.mubr.f32.gmra.mrb[0].mxu0 %v725
        %v727 = vpop.f32.mrb[0].mxu0
        %v728 = vadd.f32 %v631, %v727
        %v729 = vpop.f32.mrb[0].mxu0
        %730 = vmatprep.mubr.f32.mxu0 0.0
        %v731 = vand.u32 %v238, 4294901760
        %732 = vmatmul.mubr.f32.gmra.mrb[0].mxu0 %v731
        %v733 = vpop.f32.mrb[0].mxu0
        %v734 = vadd.f32 %v639, %v733
        %v735 = vpop.f32.mrb[0].mxu0
        %736 = vdwg.mxu0
        %737 = vmatprep.subr.mxu0 0.0
        %v738 = vand.u32 %v221, 4294901760
        %739 = vmatpush1.msra.mxu0 %v738
        %740 = vmatprep.subr.mxu0 0.0
        %v741 = vand.u32 %v222, 4294901760
        %742 = vmatpush1.msra.mxu0 %v741
        %743 = vmatprep.subr.mxu0 0.0
        %744 = vmatpush1.msra.mxu0 0.0
        %745 = vmatprep.subr.mxu0 0.0
        %746 = vmatpush1.msra.mxu0 0.0
        %747 = vmatprep.subr.mxu0 0.0
        %748 = vmatpush1.msra.mxu0 0.0
        %749 = vmatprep.subr.mxu0 0.0
        %750 = vmatpush1.msra.mxu0 0.0
        %751 = vmatprep.subr.mxu0 0.0
        %752 = vmatpush1.msra.mxu0 0.0
        %753 = vmatprep.subr.mxu0 0.0
        %754 = vmatpush1.msra.mxu0 0.0
        %755 = vmatprep.subr.mxu0 0.0
        %756 = vmatpush1.msra.mxu0 0.0
        %757 = vmatprep.subr.mxu0 0.0
        %758 = vmatpush1.msra.mxu0 0.0
        %759 = vmatprep.subr.mxu0 0.0
        %760 = vmatpush1.msra.mxu0 0.0
        %761 = vmatprep.subr.mxu0 0.0
        %762 = vmatpush1.msra.mxu0 0.0
        %763 = vmatprep.subr.mxu0 0.0
        %764 = vmatpush1.msra.mxu0 0.0
        %765 = vmatprep.subr.mxu0 0.0
        %766 = vmatpush1.msra.mxu0 0.0
        %767 = vmatprep.subr.mxu0 0.0
        %768 = vmatpush1.msra.mxu0 0.0
        %769 = vmatprep.subr.mxu0 0.0
        %770 = vmatpush1.msra.mxu0 0.0
        %771 = vmatprep.subr.mxu0 0.0
        %772 = vmatpush1.msra.mxu0 0.0
        %773 = vmatprep.subr.mxu0 0.0
        %774 = vmatpush1.msra.mxu0 0.0
        %775 = vmatprep.subr.mxu0 0.0
        %776 = vmatpush1.msra.mxu0 0.0
        %777 = vmatprep.subr.mxu0 0.0
        %778 = vmatpush1.msra.mxu0 0.0
        %779 = vmatprep.subr.mxu0 0.0
        %780 = vmatpush1.msra.mxu0 0.0
        %781 = vmatprep.subr.mxu0 0.0
        %782 = vmatpush1.msra.mxu0 0.0
        %783 = vmatprep.subr.mxu0 0.0
        %784 = vmatpush1.msra.mxu0 0.0
        %785 = vmatprep.subr.mxu0 0.0
        %786 = vmatpush1.msra.mxu0 0.0
        %787 = vmatprep.subr.mxu0 0.0
        %788 = vmatpush1.msra.mxu0 0.0
        %789 = vmatprep.subr.mxu0 0.0
        %790 = vmatpush1.msra.mxu0 0.0
        %791 = vmatprep.subr.mxu0 0.0
        %792 = vmatpush1.msra.mxu0 0.0
        %793 = vmatprep.subr.mxu0 0.0
        %794 = vmatpush1.msra.mxu0 0.0
        %795 = vmatprep.subr.mxu0 0.0
        %796 = vmatpush1.msra.mxu0 0.0
        %797 = vmatprep.subr.mxu0 0.0
        %798 = vmatpush1.msra.mxu0 0.0
        %799 = vmatprep.subr.mxu0 0.0
        %800 = vmatpush1.msra.mxu0 0.0
        %801 = vmatprep.subr.mxu0 0.0
        %802 = vmatpush1.msra.mxu0 0.0
        %803 = vmatprep.mubr.f32.mxu0 0.0
        %v804 = vand.u32 %v229, 4294901760
        %805 = vmatmul.mubr.f32.gmra.mrb[0].mxu0 %v804
        %v806 = vpop.f32.mrb[0].mxu0
        %v807 = vadd.f32 %v716, %v806
        %v808 = vpop.f32.mrb[0].mxu0
        %809 = vmatprep.mubr.f32.mxu0 0.0
        %v810 = vand.u32 %v232, 4294901760
        %811 = vmatmul.mubr.f32.gmra.mrb[0].mxu0 %v810
        %v812 = vpop.f32.mrb[0].mxu0
        %v813 = vadd.f32 %v722, %v812
        %v814 = vpop.f32.mrb[0].mxu0
        %815 = vmatprep.mubr.f32.mxu0 0.0
        %v816 = vand.u32 %v235, 4294901760
        %817 = vmatmul.mubr.f32.gmra.mrb[0].mxu0 %v816
        %v818 = vpop.f32.mrb[0].mxu0
        %v819 = vadd.f32 %v728, %v818
        %v820 = vpop.f32.mrb[0].mxu0
        %821 = vmatprep.mubr.f32.mxu0 0.0
        %v822 = vand.u32 %v238, 4294901760
        %823 = vmatmul.mubr.f32.gmra.mrb[0].mxu0 %v822
        %v824 = vpop.f32.mrb[0].mxu0
        %v825 = vadd.f32 %v734, %v824
        %v826 = vpop.f32.mrb[0].mxu0
        %827 = vdwg.mxu0
        %v829 = vsel %vm227, %v219, 0
        %v832 = vsel %vm227, %v220, 0
        %834 = vmatprep.subr.mxu0 0.0
        %v835 = vand.u32 %v807, 4294901760
        %836 = vmatpush1.msra.mxu0 %v835
        %837 = vmatprep.subr.mxu0 0.0
        %v838 = vand.u32 %v813, 4294901760
        %839 = vmatpush1.msra.mxu0 %v838
        %840 = vmatprep.subr.mxu0 0.0
        %841 = vmatpush1.msra.mxu0 0.0
        %842 = vmatprep.subr.mxu0 0.0
        %843 = vmatpush1.msra.mxu0 0.0
        %844 = vmatprep.subr.mxu0 0.0
        %845 = vmatpush1.msra.mxu0 0.0
        %846 = vmatprep.subr.mxu0 0.0
        %847 = vmatpush1.msra.mxu0 0.0
        %848 = vmatprep.subr.mxu0 0.0
        %849 = vmatpush1.msra.mxu0 0.0
        %850 = vmatprep.subr.mxu0 0.0
        %851 = vmatpush1.msra.mxu0 0.0
        %852 = vmatprep.subr.mxu0 0.0
        %853 = vmatpush1.msra.mxu0 0.0
        %854 = vmatprep.subr.mxu0 0.0
        %855 = vmatpush1.msra.mxu0 0.0
        %856 = vmatprep.subr.mxu0 0.0
        %857 = vmatpush1.msra.mxu0 0.0
        %858 = vmatprep.subr.mxu0 0.0
        %859 = vmatpush1.msra.mxu0 0.0
        %860 = vmatprep.subr.mxu0 0.0
        %861 = vmatpush1.msra.mxu0 0.0
        %862 = vmatprep.subr.mxu0 0.0
        %863 = vmatpush1.msra.mxu0 0.0
        %864 = vmatprep.subr.mxu0 0.0
        %865 = vmatpush1.msra.mxu0 0.0
        %866 = vmatprep.subr.mxu0 0.0
        %867 = vmatpush1.msra.mxu0 0.0
        %868 = vmatprep.subr.mxu0 0.0
        %869 = vmatpush1.msra.mxu0 0.0
        %870 = vmatprep.subr.mxu0 0.0
        %871 = vmatpush1.msra.mxu0 0.0
        %872 = vmatprep.subr.mxu0 0.0
        %873 = vmatpush1.msra.mxu0 0.0
        %874 = vmatprep.subr.mxu0 0.0
        %875 = vmatpush1.msra.mxu0 0.0
        %876 = vmatprep.subr.mxu0 0.0
        %877 = vmatpush1.msra.mxu0 0.0
        %878 = vmatprep.subr.mxu0 0.0
        %879 = vmatpush1.msra.mxu0 0.0
        %880 = vmatprep.subr.mxu0 0.0
        %881 = vmatpush1.msra.mxu0 0.0
        %882 = vmatprep.subr.mxu0 0.0
        %883 = vmatpush1.msra.mxu0 0.0
        %884 = vmatprep.subr.mxu0 0.0
        %885 = vmatpush1.msra.mxu0 0.0
        %886 = vmatprep.subr.mxu0 0.0
        %887 = vmatpush1.msra.mxu0 0.0
        %888 = vmatprep.subr.mxu0 0.0
        %889 = vmatpush1.msra.mxu0 0.0
        %890 = vmatprep.subr.mxu0 0.0
        %891 = vmatpush1.msra.mxu0 0.0
        %892 = vmatprep.subr.mxu0 0.0
        %893 = vmatpush1.msra.mxu0 0.0
        %894 = vmatprep.subr.mxu0 0.0
        %895 = vmatpush1.msra.mxu0 0.0
        %896 = vmatprep.subr.mxu0 0.0
        %897 = vmatpush1.msra.mxu0 0.0
        %898 = vmatprep.subr.mxu0 0.0
        %899 = vmatpush1.msra.mxu0 0.0
        %900 = vmatprep.mubr.f32.mxu0 0.0
        %v901 = vand.u32 %v829, 4294901760
        %v902 = vsub.f32 %v829, %v901
        %v903 = vand.u32 %v902, 4294901760
        %v904 = vsub.f32 %v902, %v903
        %v905 = vand.u32 %v904, 4294901760
        %906 = vmatmul.mubr.f32.gmra.mrb[0].mxu0 %v905
        %v907 = vpop.f32.mrb[0].mxu0
        %v908 = vadd.f32 0.0, %v907
        %v909 = vpop.f32.mrb[0].mxu0
        %910 = vmatprep.mubr.f32.mxu0 0.0
        %v911 = vand.u32 %v832, 4294901760
        %v912 = vsub.f32 %v832, %v911
        %v913 = vand.u32 %v912, 4294901760
        %v914 = vsub.f32 %v912, %v913
        %v915 = vand.u32 %v914, 4294901760
        %916 = vmatmul.mubr.f32.gmra.mrb[0].mxu0 %v915
        %v917 = vpop.f32.mrb[0].mxu0
        %v918 = vadd.f32 0.0, %v917
        %v919 = vpop.f32.mrb[0].mxu0
        %920 = vdwg.mxu0
        %921 = vmatprep.subr.mxu0 0.0
        %v922 = vand.u32 %v807, 4294901760
        %v923 = vsub.f32 %v807, %v922
        %v924 = vand.u32 %v923, 4294901760
        %v925 = vsub.f32 %v923, %v924
        %v926 = vand.u32 %v925, 4294901760
        %927 = vmatpush1.msra.mxu0 %v926
        %928 = vmatprep.subr.mxu0 0.0
        %v929 = vand.u32 %v813, 4294901760
        %v930 = vsub.f32 %v813, %v929
        %v931 = vand.u32 %v930, 4294901760
        %v932 = vsub.f32 %v930, %v931
        %v933 = vand.u32 %v932, 4294901760
        %934 = vmatpush1.msra.mxu0 %v933
        %935 = vmatprep.subr.mxu0 0.0
        %936 = vmatpush1.msra.mxu0 0.0
        %937 = vmatprep.subr.mxu0 0.0
        %938 = vmatpush1.msra.mxu0 0.0
        %939 = vmatprep.subr.mxu0 0.0
        %940 = vmatpush1.msra.mxu0 0.0
        %941 = vmatprep.subr.mxu0 0.0
        %942 = vmatpush1.msra.mxu0 0.0
        %943 = vmatprep.subr.mxu0 0.0
        %944 = vmatpush1.msra.mxu0 0.0
        %945 = vmatprep.subr.mxu0 0.0
        %946 = vmatpush1.msra.mxu0 0.0
        %947 = vmatprep.subr.mxu0 0.0
        %948 = vmatpush1.msra.mxu0 0.0
        %949 = vmatprep.subr.mxu0 0.0
        %950 = vmatpush1.msra.mxu0 0.0
        %951 = vmatprep.subr.mxu0 0.0
        %952 = vmatpush1.msra.mxu0 0.0
        %953 = vmatprep.subr.mxu0 0.0
        %954 = vmatpush1.msra.mxu0 0.0
        %955 = vmatprep.subr.mxu0 0.0
        %956 = vmatpush1.msra.mxu0 0.0
        %957 = vmatprep.subr.mxu0 0.0
        %958 = vmatpush1.msra.mxu0 0.0
        %959 = vmatprep.subr.mxu0 0.0
        %960 = vmatpush1.msra.mxu0 0.0
        %961 = vmatprep.subr.mxu0 0.0
        %962 = vmatpush1.msra.mxu0 0.0
        %963 = vmatprep.subr.mxu0 0.0
        %964 = vmatpush1.msra.mxu0 0.0
        %965 = vmatprep.subr.mxu0 0.0
        %966 = vmatpush1.msra.mxu0 0.0
        %967 = vmatprep.subr.mxu0 0.0
        %968 = vmatpush1.msra.mxu0 0.0
        %969 = vmatprep.subr.mxu0 0.0
        %970 = vmatpush1.msra.mxu0 0.0
        %971 = vmatprep.subr.mxu0 0.0
        %972 = vmatpush1.msra.mxu0 0.0
        %973 = vmatprep.subr.mxu0 0.0
        %974 = vmatpush1.msra.mxu0 0.0
        %975 = vmatprep.subr.mxu0 0.0
        %976 = vmatpush1.msra.mxu0 0.0
        %977 = vmatprep.subr.mxu0 0.0
        %978 = vmatpush1.msra.mxu0 0.0
        %979 = vmatprep.subr.mxu0 0.0
        %980 = vmatpush1.msra.mxu0 0.0
        %981 = vmatprep.subr.mxu0 0.0
        %982 = vmatpush1.msra.mxu0 0.0
        %983 = vmatprep.subr.mxu0 0.0
        %984 = vmatpush1.msra.mxu0 0.0
        %985 = vmatprep.subr.mxu0 0.0
        %986 = vmatpush1.msra.mxu0 0.0
        %987 = vmatprep.subr.mxu0 0.0
        %988 = vmatpush1.msra.mxu0 0.0
        %989 = vmatprep.subr.mxu0 0.0
        %990 = vmatpush1.msra.mxu0 0.0
        %991 = vmatprep.subr.mxu0 0.0
        %992 = vmatpush1.msra.mxu0 0.0
        %993 = vmatprep.subr.mxu0 0.0
        %994 = vmatpush1.msra.mxu0 0.0
        %995 = vmatprep.mubr.f32.mxu0 0.0
        %v996 = vand.u32 %v829, 4294901760
        %997 = vmatmul.mubr.f32.gmra.mrb[0].mxu0 %v996
        %v998 = vpop.f32.mrb[0].mxu0
        %v999 = vadd.f32 %v908, %v998
        %v1000 = vpop.f32.mrb[0].mxu0
        %1001 = vmatprep.mubr.f32.mxu0 0.0
        %v1002 = vand.u32 %v832, 4294901760
        %1003 = vmatmul.mubr.f32.gmra.mrb[0].mxu0 %v1002
        %v1004 = vpop.f32.mrb[0].mxu0
        %v1005 = vadd.f32 %v918, %v1004
        %v1006 = vpop.f32.mrb[0].mxu0
        %1007 = vdwg.mxu0
        %1008 = vmatprep.subr.mxu0 0.0
        %v1009 = vand.u32 %v807, 4294901760
        %v1010 = vsub.f32 %v807, %v1009
        %1011 = vmatpush1.msra.mxu0 %v1010
        %1012 = vmatprep.subr.mxu0 0.0
        %v1013 = vand.u32 %v813, 4294901760
        %v1014 = vsub.f32 %v813, %v1013
        %1015 = vmatpush1.msra.mxu0 %v1014
        %1016 = vmatprep.subr.mxu0 0.0
        %1017 = vmatpush1.msra.mxu0 0.0
        %1018 = vmatprep.subr.mxu0 0.0
        %1019 = vmatpush1.msra.mxu0 0.0
        %1020 = vmatprep.subr.mxu0 0.0
        %1021 = vmatpush1.msra.mxu0 0.0
        %1022 = vmatprep.subr.mxu0 0.0
        %1023 = vmatpush1.msra.mxu0 0.0
        %1024 = vmatprep.subr.mxu0 0.0
        %1025 = vmatpush1.msra.mxu0 0.0
        %1026 = vmatprep.subr.mxu0 0.0
        %1027 = vmatpush1.msra.mxu0 0.0
        %1028 = vmatprep.subr.mxu0 0.0
        %1029 = vmatpush1.msra.mxu0 0.0
        %1030 = vmatprep.subr.mxu0 0.0
        %1031 = vmatpush1.msra.mxu0 0.0
        %1032 = vmatprep.subr.mxu0 0.0
        %1033 = vmatpush1.msra.mxu0 0.0
        %1034 = vmatprep.subr.mxu0 0.0
        %1035 = vmatpush1.msra.mxu0 0.0
        %1036 = vmatprep.subr.mxu0 0.0
        %1037 = vmatpush1.msra.mxu0 0.0
        %1038 = vmatprep.subr.mxu0 0.0
        %1039 = vmatpush1.msra.mxu0 0.0
        %1040 = vmatprep.subr.mxu0 0.0
        %1041 = vmatpush1.msra.mxu0 0.0
        %1042 = vmatprep.subr.mxu0 0.0
        %1043 = vmatpush1.msra.mxu0 0.0
        %1044 = vmatprep.subr.mxu0 0.0
        %1045 = vmatpush1.msra.mxu0 0.0
        %1046 = vmatprep.subr.mxu0 0.0
        %1047 = vmatpush1.msra.mxu0 0.0
        %1048 = vmatprep.subr.mxu0 0.0
        %1049 = vmatpush1.msra.mxu0 0.0
        %1050 = vmatprep.subr.mxu0 0.0
        %1051 = vmatpush1.msra.mxu0 0.0
        %1052 = vmatprep.subr.mxu0 0.0
        %1053 = vmatpush1.msra.mxu0 0.0
        %1054 = vmatprep.subr.mxu0 0.0
        %1055 = vmatpush1.msra.mxu0 0.0
        %1056 = vmatprep.subr.mxu0 0.0
        %1057 = vmatpush1.msra.mxu0 0.0
        %1058 = vmatprep.subr.mxu0 0.0
        %1059 = vmatpush1.msra.mxu0 0.0
        %1060 = vmatprep.subr.mxu0 0.0
        %1061 = vmatpush1.msra.mxu0 0.0
        %1062 = vmatprep.subr.mxu0 0.0
        %1063 = vmatpush1.msra.mxu0 0.0
        %1064 = vmatprep.subr.mxu0 0.0
        %1065 = vmatpush1.msra.mxu0 0.0
        %1066 = vmatprep.subr.mxu0 0.0
        %1067 = vmatpush1.msra.mxu0 0.0
        %1068 = vmatprep.subr.mxu0 0.0
        %1069 = vmatpush1.msra.mxu0 0.0
        %1070 = vmatprep.subr.mxu0 0.0
        %1071 = vmatpush1.msra.mxu0 0.0
        %1072 = vmatprep.subr.mxu0 0.0
        %1073 = vmatpush1.msra.mxu0 0.0
        %1074 = vmatprep.subr.mxu0 0.0
        %1075 = vmatpush1.msra.mxu0 0.0
        %1076 = vmatprep.mubr.f32.mxu0 0.0
        %v1077 = vand.u32 %v829, 4294901760
        %v1078 = vsub.f32 %v829, %v1077
        %1079 = vmatmul.mubr.f32.gmra.mrb[0].mxu0 %v1078
        %v1080 = vpop.f32.mrb[0].mxu0
        %v1081 = vadd.f32 %v999, %v1080
        %v1082 = vpop.f32.mrb[0].mxu0
        %1083 = vmatprep.mubr.f32.mxu0 0.0
        %v1084 = vand.u32 %v832, 4294901760
        %v1085 = vsub.f32 %v832, %v1084
        %1086 = vmatmul.mubr.f32.gmra.mrb[0].mxu0 %v1085
        %v1087 = vpop.f32.mrb[0].mxu0
        %v1088 = vadd.f32 %v1005, %v1087
        %v1089 = vpop.f32.mrb[0].mxu0
        %1090 = vdwg.mxu0
        %1091 = vmatprep.subr.mxu0 0.0
        %v1092 = vand.u32 %v807, 4294901760
        %1093 = vmatpush1.msra.mxu0 %v1092
        %1094 = vmatprep.subr.mxu0 0.0
        %v1095 = vand.u32 %v813, 4294901760
        %1096 = vmatpush1.msra.mxu0 %v1095
        %1097 = vmatprep.subr.mxu0 0.0
        %1098 = vmatpush1.msra.mxu0 0.0
        %1099 = vmatprep.subr.mxu0 0.0
        %1100 = vmatpush1.msra.mxu0 0.0
        %1101 = vmatprep.subr.mxu0 0.0
        %1102 = vmatpush1.msra.mxu0 0.0
        %1103 = vmatprep.subr.mxu0 0.0
        %1104 = vmatpush1.msra.mxu0 0.0
        %1105 = vmatprep.subr.mxu0 0.0
        %1106 = vmatpush1.msra.mxu0 0.0
        %1107 = vmatprep.subr.mxu0 0.0
        %1108 = vmatpush1.msra.mxu0 0.0
        %1109 = vmatprep.subr.mxu0 0.0
        %1110 = vmatpush1.msra.mxu0 0.0
        %1111 = vmatprep.subr.mxu0 0.0
        %1112 = vmatpush1.msra.mxu0 0.0
        %1113 = vmatprep.subr.mxu0 0.0
        %1114 = vmatpush1.msra.mxu0 0.0
        %1115 = vmatprep.subr.mxu0 0.0
        %1116 = vmatpush1.msra.mxu0 0.0
        %1117 = vmatprep.subr.mxu0 0.0
        %1118 = vmatpush1.msra.mxu0 0.0
        %1119 = vmatprep.subr.mxu0 0.0
        %1120 = vmatpush1.msra.mxu0 0.0
        %1121 = vmatprep.subr.mxu0 0.0
        %1122 = vmatpush1.msra.mxu0 0.0
        %1123 = vmatprep.subr.mxu0 0.0
        %1124 = vmatpush1.msra.mxu0 0.0
        %1125 = vmatprep.subr.mxu0 0.0
        %1126 = vmatpush1.msra.mxu0 0.0
        %1127 = vmatprep.subr.mxu0 0.0
        %1128 = vmatpush1.msra.mxu0 0.0
        %1129 = vmatprep.subr.mxu0 0.0
        %1130 = vmatpush1.msra.mxu0 0.0
        %1131 = vmatprep.subr.mxu0 0.0
        %1132 = vmatpush1.msra.mxu0 0.0
        %1133 = vmatprep.subr.mxu0 0.0
        %1134 = vmatpush1.msra.mxu0 0.0
        %1135 = vmatprep.subr.mxu0 0.0
        %1136 = vmatpush1.msra.mxu0 0.0
        %1137 = vmatprep.subr.mxu0 0.0
        %1138 = vmatpush1.msra.mxu0 0.0
        %1139 = vmatprep.subr.mxu0 0.0
        %1140 = vmatpush1.msra.mxu0 0.0
        %1141 = vmatprep.subr.mxu0 0.0
        %1142 = vmatpush1.msra.mxu0 0.0
        %1143 = vmatprep.subr.mxu0 0.0
        %1144 = vmatpush1.msra.mxu0 0.0
        %1145 = vmatprep.subr.mxu0 0.0
        %1146 = vmatpush1.msra.mxu0 0.0
        %1147 = vmatprep.subr.mxu0 0.0
        %1148 = vmatpush1.msra.mxu0 0.0
        %1149 = vmatprep.subr.mxu0 0.0
        %1150 = vmatpush1.msra.mxu0 0.0
        %1151 = vmatprep.subr.mxu0 0.0
        %1152 = vmatpush1.msra.mxu0 0.0
        %1153 = vmatprep.subr.mxu0 0.0
        %1154 = vmatpush1.msra.mxu0 0.0
        %1155 = vmatprep.subr.mxu0 0.0
        %1156 = vmatpush1.msra.mxu0 0.0
        %1157 = vmatprep.mubr.f32.mxu0 0.0
        %v1158 = vand.u32 %v829, 4294901760
        %v1159 = vsub.f32 %v829, %v1158
        %v1160 = vand.u32 %v1159, 4294901760
        %1161 = vmatmul.mubr.f32.gmra.mrb[0].mxu0 %v1160
        %v1162 = vpop.f32.mrb[0].mxu0
        %v1163 = vadd.f32 %v1081, %v1162
        %v1164 = vpop.f32.mrb[0].mxu0
        %1165 = vmatprep.mubr.f32.mxu0 0.0
        %v1166 = vand.u32 %v832, 4294901760
        %v1167 = vsub.f32 %v832, %v1166
        %v1168 = vand.u32 %v1167, 4294901760
        %1169 = vmatmul.mubr.f32.gmra.mrb[0].mxu0 %v1168
        %v1170 = vpop.f32.mrb[0].mxu0
        %v1171 = vadd.f32 %v1088, %v1170
        %v1172 = vpop.f32.mrb[0].mxu0
        %1173 = vdwg.mxu0
        %1174 = vmatprep.subr.mxu0 0.0
        %v1175 = vand.u32 %v807, 4294901760
        %v1176 = vsub.f32 %v807, %v1175
        %v1177 = vand.u32 %v1176, 4294901760
        %1178 = vmatpush1.msra.mxu0 %v1177
        %1179 = vmatprep.subr.mxu0 0.0
        %v1180 = vand.u32 %v813, 4294901760
        %v1181 = vsub.f32 %v813, %v1180
        %v1182 = vand.u32 %v1181, 4294901760
        %1183 = vmatpush1.msra.mxu0 %v1182
        %1184 = vmatprep.subr.mxu0 0.0
        %1185 = vmatpush1.msra.mxu0 0.0
        %1186 = vmatprep.subr.mxu0 0.0
        %1187 = vmatpush1.msra.mxu0 0.0
        %1188 = vmatprep.subr.mxu0 0.0
        %1189 = vmatpush1.msra.mxu0 0.0
        %1190 = vmatprep.subr.mxu0 0.0
        %1191 = vmatpush1.msra.mxu0 0.0
        %1192 = vmatprep.subr.mxu0 0.0
        %1193 = vmatpush1.msra.mxu0 0.0
        %1194 = vmatprep.subr.mxu0 0.0
        %1195 = vmatpush1.msra.mxu0 0.0
        %1196 = vmatprep.subr.mxu0 0.0
        %1197 = vmatpush1.msra.mxu0 0.0
        %1198 = vmatprep.subr.mxu0 0.0
        %1199 = vmatpush1.msra.mxu0 0.0
        %1200 = vmatprep.subr.mxu0 0.0
        %1201 = vmatpush1.msra.mxu0 0.0
        %1202 = vmatprep.subr.mxu0 0.0
        %1203 = vmatpush1.msra.mxu0 0.0
        %1204 = vmatprep.subr.mxu0 0.0
        %1205 = vmatpush1.msra.mxu0 0.0
        %1206 = vmatprep.subr.mxu0 0.0
        %1207 = vmatpush1.msra.mxu0 0.0
        %1208 = vmatprep.subr.mxu0 0.0
        %1209 = vmatpush1.msra.mxu0 0.0
        %1210 = vmatprep.subr.mxu0 0.0
        %1211 = vmatpush1.msra.mxu0 0.0
        %1212 = vmatprep.subr.mxu0 0.0
        %1213 = vmatpush1.msra.mxu0 0.0
        %1214 = vmatprep.subr.mxu0 0.0
        %1215 = vmatpush1.msra.mxu0 0.0
        %1216 = vmatprep.subr.mxu0 0.0
        %1217 = vmatpush1.msra.mxu0 0.0
        %1218 = vmatprep.subr.mxu0 0.0
        %1219 = vmatpush1.msra.mxu0 0.0
        %1220 = vmatprep.subr.mxu0 0.0
        %1221 = vmatpush1.msra.mxu0 0.0
        %1222 = vmatprep.subr.mxu0 0.0
        %1223 = vmatpush1.msra.mxu0 0.0
        %1224 = vmatprep.subr.mxu0 0.0
        %1225 = vmatpush1.msra.mxu0 0.0
        %1226 = vmatprep.subr.mxu0 0.0
        %1227 = vmatpush1.msra.mxu0 0.0
        %1228 = vmatprep.subr.mxu0 0.0
        %1229 = vmatpush1.msra.mxu0 0.0
        %1230 = vmatprep.subr.mxu0 0.0
        %1231 = vmatpush1.msra.mxu0 0.0
        %1232 = vmatprep.subr.mxu0 0.0
        %1233 = vmatpush1.msra.mxu0 0.0
        %1234 = vmatprep.subr.mxu0 0.0
        %1235 = vmatpush1.msra.mxu0 0.0
        %1236 = vmatprep.subr.mxu0 0.0
        %1237 = vmatpush1.msra.mxu0 0.0
        %1238 = vmatprep.subr.mxu0 0.0
        %1239 = vmatpush1.msra.mxu0 0.0
        %1240 = vmatprep.subr.mxu0 0.0
        %1241 = vmatpush1.msra.mxu0 0.0
        %1242 = vmatprep.subr.mxu0 0.0
        %1243 = vmatpush1.msra.mxu0 0.0
        %1244 = vmatprep.mubr.f32.mxu0 0.0
        %v1245 = vand.u32 %v829, 4294901760
        %1246 = vmatmul.mubr.f32.gmra.mrb[0].mxu0 %v1245
        %v1247 = vpop.f32.mrb[0].mxu0
        %v1248 = vadd.f32 %v1163, %v1247
        %v1249 = vpop.f32.mrb[0].mxu0
        %1250 = vmatprep.mubr.f32.mxu0 0.0
        %v1251 = vand.u32 %v832, 4294901760
        %1252 = vmatmul.mubr.f32.gmra.mrb[0].mxu0 %v1251
        %v1253 = vpop.f32.mrb[0].mxu0
        %v1254 = vadd.f32 %v1171, %v1253
        %v1255 = vpop.f32.mrb[0].mxu0
        %1256 = vdwg.mxu0
        %1257 = vmatprep.subr.mxu0 0.0
        %v1258 = vand.u32 %v807, 4294901760
        %1259 = vmatpush1.msra.mxu0 %v1258
        %1260 = vmatprep.subr.mxu0 0.0
        %v1261 = vand.u32 %v813, 4294901760
        %1262 = vmatpush1.msra.mxu0 %v1261
        %1263 = vmatprep.subr.mxu0 0.0
        %1264 = vmatpush1.msra.mxu0 0.0
        %1265 = vmatprep.subr.mxu0 0.0
        %1266 = vmatpush1.msra.mxu0 0.0
        %1267 = vmatprep.subr.mxu0 0.0
        %1268 = vmatpush1.msra.mxu0 0.0
        %1269 = vmatprep.subr.mxu0 0.0
        %1270 = vmatpush1.msra.mxu0 0.0
        %1271 = vmatprep.subr.mxu0 0.0
        %1272 = vmatpush1.msra.mxu0 0.0
        %1273 = vmatprep.subr.mxu0 0.0
        %1274 = vmatpush1.msra.mxu0 0.0
        %1275 = vmatprep.subr.mxu0 0.0
        %1276 = vmatpush1.msra.mxu0 0.0
        %1277 = vmatprep.subr.mxu0 0.0
        %1278 = vmatpush1.msra.mxu0 0.0
        %1279 = vmatprep.subr.mxu0 0.0
        %1280 = vmatpush1.msra.mxu0 0.0
        %1281 = vmatprep.subr.mxu0 0.0
        %1282 = vmatpush1.msra.mxu0 0.0
        %1283 = vmatprep.subr.mxu0 0.0
        %1284 = vmatpush1.msra.mxu0 0.0
        %1285 = vmatprep.subr.mxu0 0.0
        %1286 = vmatpush1.msra.mxu0 0.0
        %1287 = vmatprep.subr.mxu0 0.0
        %1288 = vmatpush1.msra.mxu0 0.0
        %1289 = vmatprep.subr.mxu0 0.0
        %1290 = vmatpush1.msra.mxu0 0.0
        %1291 = vmatprep.subr.mxu0 0.0
        %1292 = vmatpush1.msra.mxu0 0.0
        %1293 = vmatprep.subr.mxu0 0.0
        %1294 = vmatpush1.msra.mxu0 0.0
        %1295 = vmatprep.subr.mxu0 0.0
        %1296 = vmatpush1.msra.mxu0 0.0
        %1297 = vmatprep.subr.mxu0 0.0
        %1298 = vmatpush1.msra.mxu0 0.0
        %1299 = vmatprep.subr.mxu0 0.0
        %1300 = vmatpush1.msra.mxu0 0.0
        %1301 = vmatprep.subr.mxu0 0.0
        %1302 = vmatpush1.msra.mxu0 0.0
        %1303 = vmatprep.subr.mxu0 0.0
        %1304 = vmatpush1.msra.mxu0 0.0
        %1305 = vmatprep.subr.mxu0 0.0
        %1306 = vmatpush1.msra.mxu0 0.0
        %1307 = vmatprep.subr.mxu0 0.0
        %1308 = vmatpush1.msra.mxu0 0.0
        %1309 = vmatprep.subr.mxu0 0.0
        %1310 = vmatpush1.msra.mxu0 0.0
        %1311 = vmatprep.subr.mxu0 0.0
        %1312 = vmatpush1.msra.mxu0 0.0
        %1313 = vmatprep.subr.mxu0 0.0
        %1314 = vmatpush1.msra.mxu0 0.0
        %1315 = vmatprep.subr.mxu0 0.0
        %1316 = vmatpush1.msra.mxu0 0.0
        %1317 = vmatprep.subr.mxu0 0.0
        %1318 = vmatpush1.msra.mxu0 0.0
        %1319 = vmatprep.subr.mxu0 0.0
        %1320 = vmatpush1.msra.mxu0 0.0
        %1321 = vmatprep.subr.mxu0 0.0
        %1322 = vmatpush1.msra.mxu0 0.0
        %1323 = vmatprep.mubr.f32.mxu0 0.0
        %v1324 = vand.u32 %v829, 4294901760
        %1325 = vmatmul.mubr.f32.gmra.mrb[0].mxu0 %v1324
        %v1326 = vpop.f32.mrb[0].mxu0
        %v1327 = vadd.f32 %v1248, %v1326
        %v1328 = vpop.f32.mrb[0].mxu0
        %1329 = vmatprep.mubr.f32.mxu0 0.0
        %v1330 = vand.u32 %v832, 4294901760
        %1331 = vmatmul.mubr.f32.gmra.mrb[0].mxu0 %v1330
        %v1332 = vpop.f32.mrb[0].mxu0
        %v1333 = vadd.f32 %v1254, %v1332
        %v1334 = vpop.f32.mrb[0].mxu0
        %1335 = vdwg.mxu0
        %1336 = vst [vmem:[%s216] sm:$0xff] %v1327
        %1337 = vst [vmem:[%s216 + $0x8] sm:$0xff] %v1333
        %1338 = vmatprep.subr.mxu0 0.0
        %v1339 = vand.u32 %v819, 4294901760
        %1340 = vmatpush1.msra.mxu0 %v1339
        %1341 = vmatprep.subr.mxu0 0.0
        %v1342 = vand.u32 %v825, 4294901760
        %1343 = vmatpush1.msra.mxu0 %v1342
        %1344 = vmatprep.subr.mxu0 0.0
        %1345 = vmatpush1.msra.mxu0 0.0
        %1346 = vmatprep.subr.mxu0 0.0
        %1347 = vmatpush1.msra.mxu0 0.0
        %1348 = vmatprep.subr.mxu0 0.0
        %1349 = vmatpush1.msra.mxu0 0.0
        %1350 = vmatprep.subr.mxu0 0.0
        %1351 = vmatpush1.msra.mxu0 0.0
        %1352 = vmatprep.subr.mxu0 0.0
        %1353 = vmatpush1.msra.mxu0 0.0
        %1354 = vmatprep.subr.mxu0 0.0
        %1355 = vmatpush1.msra.mxu0 0.0
        %1356 = vmatprep.subr.mxu0 0.0
        %1357 = vmatpush1.msra.mxu0 0.0
        %1358 = vmatprep.subr.mxu0 0.0
        %1359 = vmatpush1.msra.mxu0 0.0
        %1360 = vmatprep.subr.mxu0 0.0
        %1361 = vmatpush1.msra.mxu0 0.0
        %1362 = vmatprep.subr.mxu0 0.0
        %1363 = vmatpush1.msra.mxu0 0.0
        %1364 = vmatprep.subr.mxu0 0.0
        %1365 = vmatpush1.msra.mxu0 0.0
        %1366 = vmatprep.subr.mxu0 0.0
        %1367 = vmatpush1.msra.mxu0 0.0
        %1368 = vmatprep.subr.mxu0 0.0
        %1369 = vmatpush1.msra.mxu0 0.0
        %1370 = vmatprep.subr.mxu0 0.0
        %1371 = vmatpush1.msra.mxu0 0.0
        %1372 = vmatprep.subr.mxu0 0.0
        %1373 = vmatpush1.msra.mxu0 0.0
        %1374 = vmatprep.subr.mxu0 0.0
        %1375 = vmatpush1.msra.mxu0 0.0
        %1376 = vmatprep.subr.mxu0 0.0
        %1377 = vmatpush1.msra.mxu0 0.0
        %1378 = vmatprep.subr.mxu0 0.0
        %1379 = vmatpush1.msra.mxu0 0.0
        %1380 = vmatprep.subr.mxu0 0.0
        %1381 = vmatpush1.msra.mxu0 0.0
        %1382 = vmatprep.subr.mxu0 0.0
        %1383 = vmatpush1.msra.mxu0 0.0
        %1384 = vmatprep.subr.mxu0 0.0
        %1385 = vmatpush1.msra.mxu0 0.0
        %1386 = vmatprep.subr.mxu0 0.0
        %1387 = vmatpush1.msra.mxu0 0.0
        %1388 = vmatprep.subr.mxu0 0.0
        %1389 = vmatpush1.msra.mxu0 0.0
        %1390 = vmatprep.subr.mxu0 0.0
        %1391 = vmatpush1.msra.mxu0 0.0
        %1392 = vmatprep.subr.mxu0 0.0
        %1393 = vmatpush1.msra.mxu0 0.0
        %1394 = vmatprep.subr.mxu0 0.0
        %1395 = vmatpush1.msra.mxu0 0.0
        %1396 = vmatprep.subr.mxu0 0.0
        %1397 = vmatpush1.msra.mxu0 0.0
        %1398 = vmatprep.subr.mxu0 0.0
        %1399 = vmatpush1.msra.mxu0 0.0
        %1400 = vmatprep.subr.mxu0 0.0
        %1401 = vmatpush1.msra.mxu0 0.0
        %1402 = vmatprep.subr.mxu0 0.0
        %1403 = vmatpush1.msra.mxu0 0.0
        %1404 = vmatprep.mubr.f32.mxu0 0.0
        %v1405 = vand.u32 %v829, 4294901760
        %v1406 = vsub.f32 %v829, %v1405
        %v1407 = vand.u32 %v1406, 4294901760
        %v1408 = vsub.f32 %v1406, %v1407
        %v1409 = vand.u32 %v1408, 4294901760
        %1410 = vmatmul.mubr.f32.gmra.mrb[0].mxu0 %v1409
        %v1411 = vpop.f32.mrb[0].mxu0
        %v1412 = vadd.f32 0.0, %v1411
        %v1413 = vpop.f32.mrb[0].mxu0
        %1414 = vmatprep.mubr.f32.mxu0 0.0
        %v1415 = vand.u32 %v832, 4294901760
        %v1416 = vsub.f32 %v832, %v1415
        %v1417 = vand.u32 %v1416, 4294901760
        %v1418 = vsub.f32 %v1416, %v1417
        %v1419 = vand.u32 %v1418, 4294901760
        %1420 = vmatmul.mubr.f32.gmra.mrb[0].mxu0 %v1419
        %v1421 = vpop.f32.mrb[0].mxu0
        %v1422 = vadd.f32 0.0, %v1421
        %v1423 = vpop.f32.mrb[0].mxu0
        %1424 = vdwg.mxu0
        %1425 = vmatprep.subr.mxu0 0.0
        %v1426 = vand.u32 %v819, 4294901760
        %v1427 = vsub.f32 %v819, %v1426
        %v1428 = vand.u32 %v1427, 4294901760
        %v1429 = vsub.f32 %v1427, %v1428
        %v1430 = vand.u32 %v1429, 4294901760
        %1431 = vmatpush1.msra.mxu0 %v1430
        %1432 = vmatprep.subr.mxu0 0.0
        %v1433 = vand.u32 %v825, 4294901760
        %v1434 = vsub.f32 %v825, %v1433
        %v1435 = vand.u32 %v1434, 4294901760
        %v1436 = vsub.f32 %v1434, %v1435
        %v1437 = vand.u32 %v1436, 4294901760
        %1438 = vmatpush1.msra.mxu0 %v1437
        %1439 = vmatprep.subr.mxu0 0.0
        %1440 = vmatpush1.msra.mxu0 0.0
        %1441 = vmatprep.subr.mxu0 0.0
        %1442 = vmatpush1.msra.mxu0 0.0
        %1443 = vmatprep.subr.mxu0 0.0
        %1444 = vmatpush1.msra.mxu0 0.0
        %1445 = vmatprep.subr.mxu0 0.0
        %1446 = vmatpush1.msra.mxu0 0.0
        %1447 = vmatprep.subr.mxu0 0.0
        %1448 = vmatpush1.msra.mxu0 0.0
        %1449 = vmatprep.subr.mxu0 0.0
        %1450 = vmatpush1.msra.mxu0 0.0
        %1451 = vmatprep.subr.mxu0 0.0
        %1452 = vmatpush1.msra.mxu0 0.0
        %1453 = vmatprep.subr.mxu0 0.0
        %1454 = vmatpush1.msra.mxu0 0.0
        %1455 = vmatprep.subr.mxu0 0.0
        %1456 = vmatpush1.msra.mxu0 0.0
        %1457 = vmatprep.subr.mxu0 0.0
        %1458 = vmatpush1.msra.mxu0 0.0
        %1459 = vmatprep.subr.mxu0 0.0
        %1460 = vmatpush1.msra.mxu0 0.0
        %1461 = vmatprep.subr.mxu0 0.0
        %1462 = vmatpush1.msra.mxu0 0.0
        %1463 = vmatprep.subr.mxu0 0.0
        %1464 = vmatpush1.msra.mxu0 0.0
        %1465 = vmatprep.subr.mxu0 0.0
        %1466 = vmatpush1.msra.mxu0 0.0
        %1467 = vmatprep.subr.mxu0 0.0
        %1468 = vmatpush1.msra.mxu0 0.0
        %1469 = vmatprep.subr.mxu0 0.0
        %1470 = vmatpush1.msra.mxu0 0.0
        %1471 = vmatprep.subr.mxu0 0.0
        %1472 = vmatpush1.msra.mxu0 0.0
        %1473 = vmatprep.subr.mxu0 0.0
        %1474 = vmatpush1.msra.mxu0 0.0
        %1475 = vmatprep.subr.mxu0 0.0
        %1476 = vmatpush1.msra.mxu0 0.0
        %1477 = vmatprep.subr.mxu0 0.0
        %1478 = vmatpush1.msra.mxu0 0.0
        %1479 = vmatprep.subr.mxu0 0.0
        %1480 = vmatpush1.msra.mxu0 0.0
        %1481 = vmatprep.subr.mxu0 0.0
        %1482 = vmatpush1.msra.mxu0 0.0
        %1483 = vmatprep.subr.mxu0 0.0
        %1484 = vmatpush1.msra.mxu0 0.0
        %1485 = vmatprep.subr.mxu0 0.0
        %1486 = vmatpush1.msra.mxu0 0.0
        %1487 = vmatprep.subr.mxu0 0.0
        %1488 = vmatpush1.msra.mxu0 0.0
        %1489 = vmatprep.subr.mxu0 0.0
        %1490 = vmatpush1.msra.mxu0 0.0
        %1491 = vmatprep.subr.mxu0 0.0
        %1492 = vmatpush1.msra.mxu0 0.0
        %1493 = vmatprep.subr.mxu0 0.0
        %1494 = vmatpush1.msra.mxu0 0.0
        %1495 = vmatprep.subr.mxu0 0.0
        %1496 = vmatpush1.msra.mxu0 0.0
        %1497 = vmatprep.subr.mxu0 0.0
        %1498 = vmatpush1.msra.mxu0 0.0
        %1499 = vmatprep.mubr.f32.mxu0 0.0
        %v1500 = vand.u32 %v829, 4294901760
        %1501 = vmatmul.mubr.f32.gmra.mrb[0].mxu0 %v1500
        %v1502 = vpop.f32.mrb[0].mxu0
        %v1503 = vadd.f32 %v1412, %v1502
        %v1504 = vpop.f32.mrb[0].mxu0
        %1505 = vmatprep.mubr.f32.mxu0 0.0
        %v1506 = vand.u32 %v832, 4294901760
        %1507 = vmatmul.mubr.f32.gmra.mrb[0].mxu0 %v1506
        %v1508 = vpop.f32.mrb[0].mxu0
        %v1509 = vadd.f32 %v1422, %v1508
        %v1510 = vpop.f32.mrb[0].mxu0
        %1511 = vdwg.mxu0
        %1512 = vmatprep.subr.mxu0 0.0
        %v1513 = vand.u32 %v819, 4294901760
        %v1514 = vsub.f32 %v819, %v1513
        %1515 = vmatpush1.msra.mxu0 %v1514
        %1516 = vmatprep.subr.mxu0 0.0
        %v1517 = vand.u32 %v825, 4294901760
        %v1518 = vsub.f32 %v825, %v1517
        %1519 = vmatpush1.msra.mxu0 %v1518
        %1520 = vmatprep.subr.mxu0 0.0
        %1521 = vmatpush1.msra.mxu0 0.0
        %1522 = vmatprep.subr.mxu0 0.0
        %1523 = vmatpush1.msra.mxu0 0.0
        %1524 = vmatprep.subr.mxu0 0.0
        %1525 = vmatpush1.msra.mxu0 0.0
        %1526 = vmatprep.subr.mxu0 0.0
        %1527 = vmatpush1.msra.mxu0 0.0
        %1528 = vmatprep.subr.mxu0 0.0
        %1529 = vmatpush1.msra.mxu0 0.0
        %1530 = vmatprep.subr.mxu0 0.0
        %1531 = vmatpush1.msra.mxu0 0.0
        %1532 = vmatprep.subr.mxu0 0.0
        %1533 = vmatpush1.msra.mxu0 0.0
        %1534 = vmatprep.subr.mxu0 0.0
        %1535 = vmatpush1.msra.mxu0 0.0
        %1536 = vmatprep.subr.mxu0 0.0
        %1537 = vmatpush1.msra.mxu0 0.0
        %1538 = vmatprep.subr.mxu0 0.0
        %1539 = vmatpush1.msra.mxu0 0.0
        %1540 = vmatprep.subr.mxu0 0.0
        %1541 = vmatpush1.msra.mxu0 0.0
        %1542 = vmatprep.subr.mxu0 0.0
        %1543 = vmatpush1.msra.mxu0 0.0
        %1544 = vmatprep.subr.mxu0 0.0
        %1545 = vmatpush1.msra.mxu0 0.0
        %1546 = vmatprep.subr.mxu0 0.0
        %1547 = vmatpush1.msra.mxu0 0.0
        %1548 = vmatprep.subr.mxu0 0.0
        %1549 = vmatpush1.msra.mxu0 0.0
        %1550 = vmatprep.subr.mxu0 0.0
        %1551 = vmatpush1.msra.mxu0 0.0
        %1552 = vmatprep.subr.mxu0 0.0
        %1553 = vmatpush1.msra.mxu0 0.0
        %1554 = vmatprep.subr.mxu0 0.0
        %1555 = vmatpush1.msra.mxu0 0.0
        %1556 = vmatprep.subr.mxu0 0.0
        %1557 = vmatpush1.msra.mxu0 0.0
        %1558 = vmatprep.subr.mxu0 0.0
        %1559 = vmatpush1.msra.mxu0 0.0
        %1560 = vmatprep.subr.mxu0 0.0
        %1561 = vmatpush1.msra.mxu0 0.0
        %1562 = vmatprep.subr.mxu0 0.0
        %1563 = vmatpush1.msra.mxu0 0.0
        %1564 = vmatprep.subr.mxu0 0.0
        %1565 = vmatpush1.msra.mxu0 0.0
        %1566 = vmatprep.subr.mxu0 0.0
        %1567 = vmatpush1.msra.mxu0 0.0
        %1568 = vmatprep.subr.mxu0 0.0
        %1569 = vmatpush1.msra.mxu0 0.0
        %1570 = vmatprep.subr.mxu0 0.0
        %1571 = vmatpush1.msra.mxu0 0.0
        %1572 = vmatprep.subr.mxu0 0.0
        %1573 = vmatpush1.msra.mxu0 0.0
        %1574 = vmatprep.subr.mxu0 0.0
        %1575 = vmatpush1.msra.mxu0 0.0
        %1576 = vmatprep.subr.mxu0 0.0
        %1577 = vmatpush1.msra.mxu0 0.0
        %1578 = vmatprep.subr.mxu0 0.0
        %1579 = vmatpush1.msra.mxu0 0.0
        %1580 = vmatprep.mubr.f32.mxu0 0.0
        %v1581 = vand.u32 %v829, 4294901760
        %v1582 = vsub.f32 %v829, %v1581
        %1583 = vmatmul.mubr.f32.gmra.mrb[0].mxu0 %v1582
        %v1584 = vpop.f32.mrb[0].mxu0
        %v1585 = vadd.f32 %v1503, %v1584
        %v1586 = vpop.f32.mrb[0].mxu0
        %1587 = vmatprep.mubr.f32.mxu0 0.0
        %v1588 = vand.u32 %v832, 4294901760
        %v1589 = vsub.f32 %v832, %v1588
        %1590 = vmatmul.mubr.f32.gmra.mrb[0].mxu0 %v1589
        %v1591 = vpop.f32.mrb[0].mxu0
        %v1592 = vadd.f32 %v1509, %v1591
        %v1593 = vpop.f32.mrb[0].mxu0
        %1594 = vdwg.mxu0
        %1595 = vmatprep.subr.mxu0 0.0
        %v1596 = vand.u32 %v819, 4294901760
        %1597 = vmatpush1.msra.mxu0 %v1596
        %1598 = vmatprep.subr.mxu0 0.0
        %v1599 = vand.u32 %v825, 4294901760
        %1600 = vmatpush1.msra.mxu0 %v1599
        %1601 = vmatprep.subr.mxu0 0.0
        %1602 = vmatpush1.msra.mxu0 0.0
        %1603 = vmatprep.subr.mxu0 0.0
        %1604 = vmatpush1.msra.mxu0 0.0
        %1605 = vmatprep.subr.mxu0 0.0
        %1606 = vmatpush1.msra.mxu0 0.0
        %1607 = vmatprep.subr.mxu0 0.0
        %1608 = vmatpush1.msra.mxu0 0.0
        %1609 = vmatprep.subr.mxu0 0.0
        %1610 = vmatpush1.msra.mxu0 0.0
        %1611 = vmatprep.subr.mxu0 0.0
        %1612 = vmatpush1.msra.mxu0 0.0
        %1613 = vmatprep.subr.mxu0 0.0
        %1614 = vmatpush1.msra.mxu0 0.0
        %1615 = vmatprep.subr.mxu0 0.0
        %1616 = vmatpush1.msra.mxu0 0.0
        %1617 = vmatprep.subr.mxu0 0.0
        %1618 = vmatpush1.msra.mxu0 0.0
        %1619 = vmatprep.subr.mxu0 0.0
        %1620 = vmatpush1.msra.mxu0 0.0
        %1621 = vmatprep.subr.mxu0 0.0
        %1622 = vmatpush1.msra.mxu0 0.0
        %1623 = vmatprep.subr.mxu0 0.0
        %1624 = vmatpush1.msra.mxu0 0.0
        %1625 = vmatprep.subr.mxu0 0.0
        %1626 = vmatpush1.msra.mxu0 0.0
        %1627 = vmatprep.subr.mxu0 0.0
        %1628 = vmatpush1.msra.mxu0 0.0
        %1629 = vmatprep.subr.mxu0 0.0
        %1630 = vmatpush1.msra.mxu0 0.0
        %1631 = vmatprep.subr.mxu0 0.0
        %1632 = vmatpush1.msra.mxu0 0.0
        %1633 = vmatprep.subr.mxu0 0.0
        %1634 = vmatpush1.msra.mxu0 0.0
        %1635 = vmatprep.subr.mxu0 0.0
        %1636 = vmatpush1.msra.mxu0 0.0
        %1637 = vmatprep.subr.mxu0 0.0
        %1638 = vmatpush1.msra.mxu0 0.0
        %1639 = vmatprep.subr.mxu0 0.0
        %1640 = vmatpush1.msra.mxu0 0.0
        %1641 = vmatprep.subr.mxu0 0.0
        %1642 = vmatpush1.msra.mxu0 0.0
        %1643 = vmatprep.subr.mxu0 0.0
        %1644 = vmatpush1.msra.mxu0 0.0
        %1645 = vmatprep.subr.mxu0 0.0
        %1646 = vmatpush1.msra.mxu0 0.0
        %1647 = vmatprep.subr.mxu0 0.0
        %1648 = vmatpush1.msra.mxu0 0.0
        %1649 = vmatprep.subr.mxu0 0.0
        %1650 = vmatpush1.msra.mxu0 0.0
        %1651 = vmatprep.subr.mxu0 0.0
        %1652 = vmatpush1.msra.mxu0 0.0
        %1653 = vmatprep.subr.mxu0 0.0
        %1654 = vmatpush1.msra.mxu0 0.0
        %1655 = vmatprep.subr.mxu0 0.0
        %1656 = vmatpush1.msra.mxu0 0.0
        %1657 = vmatprep.subr.mxu0 0.0
        %1658 = vmatpush1.msra.mxu0 0.0
        %1659 = vmatprep.subr.mxu0 0.0
        %1660 = vmatpush1.msra.mxu0 0.0
        %1661 = vmatprep.mubr.f32.mxu0 0.0
        %v1662 = vand.u32 %v829, 4294901760
        %v1663 = vsub.f32 %v829, %v1662
        %v1664 = vand.u32 %v1663, 4294901760
        %1665 = vmatmul.mubr.f32.gmra.mrb[0].mxu0 %v1664
        %v1666 = vpop.f32.mrb[0].mxu0
        %v1667 = vadd.f32 %v1585, %v1666
        %v1668 = vpop.f32.mrb[0].mxu0
        %1669 = vmatprep.mubr.f32.mxu0 0.0
        %v1670 = vand.u32 %v832, 4294901760
        %v1671 = vsub.f32 %v832, %v1670
        %v1672 = vand.u32 %v1671, 4294901760
        %1673 = vmatmul.mubr.f32.gmra.mrb[0].mxu0 %v1672
        %v1674 = vpop.f32.mrb[0].mxu0
        %v1675 = vadd.f32 %v1592, %v1674
        %v1676 = vpop.f32.mrb[0].mxu0
        %1677 = vdwg.mxu0
        %1678 = vmatprep.subr.mxu0 0.0
        %v1679 = vand.u32 %v819, 4294901760
        %v1680 = vsub.f32 %v819, %v1679
        %v1681 = vand.u32 %v1680, 4294901760
        %1682 = vmatpush1.msra.mxu0 %v1681
        %1683 = vmatprep.subr.mxu0 0.0
        %v1684 = vand.u32 %v825, 4294901760
        %v1685 = vsub.f32 %v825, %v1684
        %v1686 = vand.u32 %v1685, 4294901760
        %1687 = vmatpush1.msra.mxu0 %v1686
        %1688 = vmatprep.subr.mxu0 0.0
        %1689 = vmatpush1.msra.mxu0 0.0
        %1690 = vmatprep.subr.mxu0 0.0
        %1691 = vmatpush1.msra.mxu0 0.0
        %1692 = vmatprep.subr.mxu0 0.0
        %1693 = vmatpush1.msra.mxu0 0.0
        %1694 = vmatprep.subr.mxu0 0.0
        %1695 = vmatpush1.msra.mxu0 0.0
        %1696 = vmatprep.subr.mxu0 0.0
        %1697 = vmatpush1.msra.mxu0 0.0
        %1698 = vmatprep.subr.mxu0 0.0
        %1699 = vmatpush1.msra.mxu0 0.0
        %1700 = vmatprep.subr.mxu0 0.0
        %1701 = vmatpush1.msra.mxu0 0.0
        %1702 = vmatprep.subr.mxu0 0.0
        %1703 = vmatpush1.msra.mxu0 0.0
        %1704 = vmatprep.subr.mxu0 0.0
        %1705 = vmatpush1.msra.mxu0 0.0
        %1706 = vmatprep.subr.mxu0 0.0
        %1707 = vmatpush1.msra.mxu0 0.0
        %1708 = vmatprep.subr.mxu0 0.0
        %1709 = vmatpush1.msra.mxu0 0.0
        %1710 = vmatprep.subr.mxu0 0.0
        %1711 = vmatpush1.msra.mxu0 0.0
        %1712 = vmatprep.subr.mxu0 0.0
        %1713 = vmatpush1.msra.mxu0 0.0
        %1714 = vmatprep.subr.mxu0 0.0
        %1715 = vmatpush1.msra.mxu0 0.0
        %1716 = vmatprep.subr.mxu0 0.0
        %1717 = vmatpush1.msra.mxu0 0.0
        %1718 = vmatprep.subr.mxu0 0.0
        %1719 = vmatpush1.msra.mxu0 0.0
        %1720 = vmatprep.subr.mxu0 0.0
        %1721 = vmatpush1.msra.mxu0 0.0
        %1722 = vmatprep.subr.mxu0 0.0
        %1723 = vmatpush1.msra.mxu0 0.0
        %1724 = vmatprep.subr.mxu0 0.0
        %1725 = vmatpush1.msra.mxu0 0.0
        %1726 = vmatprep.subr.mxu0 0.0
        %1727 = vmatpush1.msra.mxu0 0.0
        %1728 = vmatprep.subr.mxu0 0.0
        %1729 = vmatpush1.msra.mxu0 0.0
        %1730 = vmatprep.subr.mxu0 0.0
        %1731 = vmatpush1.msra.mxu0 0.0
        %1732 = vmatprep.subr.mxu0 0.0
        %1733 = vmatpush1.msra.mxu0 0.0
        %1734 = vmatprep.subr.mxu0 0.0
        %1735 = vmatpush1.msra.mxu0 0.0
        %1736 = vmatprep.subr.mxu0 0.0
        %1737 = vmatpush1.msra.mxu0 0.0
        %1738 = vmatprep.subr.mxu0 0.0
        %1739 = vmatpush1.msra.mxu0 0.0
        %1740 = vmatprep.subr.mxu0 0.0
        %1741 = vmatpush1.msra.mxu0 0.0
        %1742 = vmatprep.subr.mxu0 0.0
        %1743 = vmatpush1.msra.mxu0 0.0
        %1744 = vmatprep.subr.mxu0 0.0
        %1745 = vmatpush1.msra.mxu0 0.0
        %1746 = vmatprep.subr.mxu0 0.0
        %1747 = vmatpush1.msra.mxu0 0.0
        %1748 = vmatprep.mubr.f32.mxu0 0.0
        %v1749 = vand.u32 %v829, 4294901760
        %1750 = vmatmul.mubr.f32.gmra.mrb[0].mxu0 %v1749
        %v1751 = vpop.f32.mrb[0].mxu0
        %v1752 = vadd.f32 %v1667, %v1751
        %v1753 = vpop.f32.mrb[0].mxu0
        %1754 = vmatprep.mubr.f32.mxu0 0.0
        %v1755 = vand.u32 %v832, 4294901760
        %1756 = vmatmul.mubr.f32.gmra.mrb[0].mxu0 %v1755
        %v1757 = vpop.f32.mrb[0].mxu0
        %v1758 = vadd.f32 %v1675, %v1757
        %v1759 = vpop.f32.mrb[0].mxu0
        %1760 = vdwg.mxu0
        %1761 = vmatprep.subr.mxu0 0.0
        %v1762 = vand.u32 %v819, 4294901760
        %1763 = vmatpush1.msra.mxu0 %v1762
        %1764 = vmatprep.subr.mxu0 0.0
        %v1765 = vand.u32 %v825, 4294901760
        %1766 = vmatpush1.msra.mxu0 %v1765
        %1767 = vmatprep.subr.mxu0 0.0
        %1768 = vmatpush1.msra.mxu0 0.0
        %1769 = vmatprep.subr.mxu0 0.0
        %1770 = vmatpush1.msra.mxu0 0.0
        %1771 = vmatprep.subr.mxu0 0.0
        %1772 = vmatpush1.msra.mxu0 0.0
        %1773 = vmatprep.subr.mxu0 0.0
        %1774 = vmatpush1.msra.mxu0 0.0
        %1775 = vmatprep.subr.mxu0 0.0
        %1776 = vmatpush1.msra.mxu0 0.0
        %1777 = vmatprep.subr.mxu0 0.0
        %1778 = vmatpush1.msra.mxu0 0.0
        %1779 = vmatprep.subr.mxu0 0.0
        %1780 = vmatpush1.msra.mxu0 0.0
        %1781 = vmatprep.subr.mxu0 0.0
        %1782 = vmatpush1.msra.mxu0 0.0
        %1783 = vmatprep.subr.mxu0 0.0
        %1784 = vmatpush1.msra.mxu0 0.0
        %1785 = vmatprep.subr.mxu0 0.0
        %1786 = vmatpush1.msra.mxu0 0.0
        %1787 = vmatprep.subr.mxu0 0.0
        %1788 = vmatpush1.msra.mxu0 0.0
        %1789 = vmatprep.subr.mxu0 0.0
        %1790 = vmatpush1.msra.mxu0 0.0
        %1791 = vmatprep.subr.mxu0 0.0
        %1792 = vmatpush1.msra.mxu0 0.0
        %1793 = vmatprep.subr.mxu0 0.0
        %1794 = vmatpush1.msra.mxu0 0.0
        %1795 = vmatprep.subr.mxu0 0.0
        %1796 = vmatpush1.msra.mxu0 0.0
        %1797 = vmatprep.subr.mxu0 0.0
        %1798 = vmatpush1.msra.mxu0 0.0
        %1799 = vmatprep.subr.mxu0 0.0
        %1800 = vmatpush1.msra.mxu0 0.0
        %1801 = vmatprep.subr.mxu0 0.0
        %1802 = vmatpush1.msra.mxu0 0.0
        %1803 = vmatprep.subr.mxu0 0.0
        %1804 = vmatpush1.msra.mxu0 0.0
        %1805 = vmatprep.subr.mxu0 0.0
        %1806 = vmatpush1.msra.mxu0 0.0
        %1807 = vmatprep.subr.mxu0 0.0
        %1808 = vmatpush1.msra.mxu0 0.0
        %1809 = vmatprep.subr.mxu0 0.0
        %1810 = vmatpush1.msra.mxu0 0.0
        %1811 = vmatprep.subr.mxu0 0.0
        %1812 = vmatpush1.msra.mxu0 0.0
        %1813 = vmatprep.subr.mxu0 0.0
        %1814 = vmatpush1.msra.mxu0 0.0
        %1815 = vmatprep.subr.mxu0 0.0
        %1816 = vmatpush1.msra.mxu0 0.0
        %1817 = vmatprep.subr.mxu0 0.0
        %1818 = vmatpush1.msra.mxu0 0.0
        %1819 = vmatprep.subr.mxu0 0.0
        %1820 = vmatpush1.msra.mxu0 0.0
        %1821 = vmatprep.subr.mxu0 0.0
        %1822 = vmatpush1.msra.mxu0 0.0
        %1823 = vmatprep.subr.mxu0 0.0
        %1824 = vmatpush1.msra.mxu0 0.0
        %1825 = vmatprep.subr.mxu0 0.0
        %1826 = vmatpush1.msra.mxu0 0.0
        %1827 = vmatprep.mubr.f32.mxu0 0.0
        %v1828 = vand.u32 %v829, 4294901760
        %1829 = vmatmul.mubr.f32.gmra.mrb[0].mxu0 %v1828
        %v1830 = vpop.f32.mrb[0].mxu0
        %v1831 = vadd.f32 %v1752, %v1830
        %v1832 = vpop.f32.mrb[0].mxu0
        %1833 = vmatprep.mubr.f32.mxu0 0.0
        %v1834 = vand.u32 %v832, 4294901760
        %1835 = vmatmul.mubr.f32.gmra.mrb[0].mxu0 %v1834
        %v1836 = vpop.f32.mrb[0].mxu0
        %v1837 = vadd.f32 %v1758, %v1836
        %v1838 = vpop.f32.mrb[0].mxu0
        %1839 = vdwg.mxu0
        %s1840 = scalar_lea.vmem %s216, 16 [#allocation8]
        %1841 = vst [vmem:[%s1840] sm:$0xff] %v1831
        %1842 = vst [vmem:[%s1840 + $0x8] sm:$0xff] %v1837
        %s1843 = sand.u32 %s95, 1
        %s1844 = scalar_lea.sflag [#allocation4], %s1843
        %s1845 = sand.u32 %s95, 1
        %s1846 = smul.addr %s1845, 32
        %s1847 = scalar_lea.vmem [#allocation8], %s1846
        // Predicated region
        $region45: #{tpu_custom_call.1} parent=31 // pred_check
          %p1848 = pneg %p105
        $region46: #{tpu_custom_call.1} parent=31 // pred_check_branch
          %1850 = sbr.rel (%p1848) target = $region48
        $region47: #{tpu_custom_call.1} parent=31 // pred_region
          %s1851 = smul.u32 2, %s19
          %s1853 = ssub.s32 512, 512
          %1854 = vsyncadd %s1844, %s1853
          %s1855 = smul.addr %s1851, 2
          %s1856 = smul.addr %s1855, 128
          %s1857 = scalar_lea.hbm %s3, %s1856
          %s1858 = sshll.u32 %s1847, 4
          %s1859 = int_to_ptr.vmem [resolvable:$true] %s1858
          %1864 = dma.vmem_to_hbm [thread:$0]  %s1859, 512, %s1857, %s1844, 128, 128, 8
        $region48: #{tpu_custom_call.1} parent=31 // pred_fallthru
          _
      $region32: #{tpu_custom_call.1} parent=5 // pred_fallthru
        _
      %p1865 = scmp.le.s32.totalorder 2, %s14
      // Predicated region
      $region49: #{tpu_custom_call.1} parent=5 // pred_check
        %p1866 = pneg %p1865
      $region50: #{tpu_custom_call.1} parent=5 // pred_check_branch
        %1868 = sbr.rel (%p1866) target = $region52
      $region51: #{tpu_custom_call.1} parent=5 // pred_region
        %s1869 = ssub.s32 %s14, 2
        // Predicated region
        $region53: #{tpu_custom_call.1} parent=51 // pred_check
          %p1870 = pneg %p111
        $region54: #{tpu_custom_call.1} parent=51 // pred_check_branch
          %1872 = sbr.rel (%p1870) target = $region56
        $region55: #{tpu_custom_call.1} parent=51 // pred_region
          %s1873 = sand.u32 %s96, 1
          %s1874 = scalar_lea.sflag [#allocation4], %s1873
          %s1875 = sand.u32 %s96, 1
          %s1876 = smul.addr %s1875, 32
          %s1877 = scalar_lea.vmem [#allocation8], %s1876
          %1878 = dma.done %s1874, 512
        $region56: #{tpu_custom_call.1} parent=51 // pred_fallthru
          _
      $region52: #{tpu_custom_call.1} parent=5 // pred_fallthru
        _
    $region6: #{tpu_custom_call.1} parent=1 // loop_footer
      %s18 = sadd.s32 1, %s14
    $region7: #{tpu_custom_call.1} parent=1 // loop_footer_branch
      %13 = sbr.rel target = $region3
    $region8: #{tpu_custom_call.1} parent=1 // loop_exit
      _
    %1879 = vsyncpa [#allocation3], 1
    %s1880 = scalar_lea.sflag [#allocation3], 1
    %1881 = vsyncpa %s1880, 1
    %1882 = vsyncpa [#allocation6], 1
    %1883 = vsyncpa [#allocation4], 1
    %s1884 = scalar_lea.sflag [#allocation4], 1
    %1885 = vsyncpa %s1884, 1

</llo_original>
